<compile_context>
chip_gen: v5e
topology: v5e:2x2
jax: 0.10.0
libtpu: 0.0.40
codegen_flags: <defaults>
</compile_context>

<pallas_src>
import jax
import jax.numpy as jnp
from jax.experimental import pallas as pl
from jax.experimental.pallas import tpu as pltpu

BN_EPS = 1e-5
# 3x3 tap offsets (dh, dw) -- the same ordering is used for the packed weights.
TAPS = tuple((dh, dw) for dh in (-1, 0, 1) for dw in (-1, 0, 1))


def _tap_plan(stride, Wout):
    """Per tap: (parity-slab index, flat row shift on the output grid, w-wrap dir)."""
    plan = []
    for dh, dw in TAPS:
        qh, rh = divmod(dh, stride)          # input row  = stride*(ho+qh) + rh
        qw, rw = divmod(dw, stride)          # input col  = stride*(wo+qw) + rw
        assert qh in (-1, 0, 1) and qw in (-1, 0, 1)
        plan.append((rh * stride + rw, qh * Wout + qw, qw))
    return tuple(plan)


def _make_kernel(Hout, Wout, Cin, Cout, HWP, MPAD, plan1, has_proj, fuse1, fuse2):
    HW = Hout * Wout
    plan2 = _tap_plan(1, Wout)               # conv2: stride-1 taps on the output grid
    f32, bf16 = jnp.float32, jnp.bfloat16

    def conv(read_tap, plan, w_ref, left_ok, right_ok, fuse):
        taps = []
        for slab_idx, shift, qw in plan:
            tap = read_tap(slab_idx, shift)              # (HW, C) f32
            if qw < 0:                                   # crosses the left image edge
                tap = jnp.where(left_ok, tap, 0.0)
            elif qw > 0:                                 # crosses the right image edge
                tap = jnp.where(right_ok, tap, 0.0)
            taps.append(tap.astype(bf16))                # bf16 operands for the MXU
        if fuse:
            # ONE fused im2col matmul: (HW, 9*C) @ (9*C, Cout), f32 accumulation.
            cols = jnp.concatenate(taps, axis=-1)
            return jnp.dot(cols, w_ref[...], preferred_element_type=f32)
        # Lane-unaligned channel count (tiny test channels): 9 accumulated matmuls.
        acc = jnp.zeros((HW, w_ref.shape[-1]), f32)
        for t, tap in enumerate(taps):
            acc = acc + jnp.dot(tap, w_ref[t], preferred_element_type=f32)
        return acc

    def kernel(x_ref, w1_ref, b1_ref, *rest):
        if has_proj:
            wsc_ref, bsc_ref, w2_ref, b2_ref, out_ref, pad_ref = rest
        else:
            w2_ref, b2_ref, out_ref, pad_ref = rest

        # In-kernel w-edge masks (h-edges are handled by the zero row-margins).
        def edge_masks(c):
            ww = jax.lax.broadcasted_iota(jnp.int32, (HW, c), 0) % Wout
            return ww >= 1, ww <= Wout - 2

        lin, rin = edge_masks(Cin)
        lout, rout = edge_masks(Cout)

        # ---- conv1 (+ folded BN1) + ReLU ----
        y1 = conv(lambda si, sh: x_ref[pl.ds(si * HWP + MPAD + sh, HW), :],
                  plan1, w1_ref, lin, rin, fuse1) + b1_ref[...]
        y1 = jnp.maximum(y1, 0.0)

        # ---- shortcut: center tap of the same input block (no extra HBM operand) ----
        center = x_ref[pl.ds(MPAD, HW), :]               # (HW, Cin) f32
        if has_proj:                                     # folded 1x1 conv + BN
            sc = jnp.dot(center.astype(bf16), wsc_ref[...],
                         preferred_element_type=f32) + bsc_ref[...]
        else:                                            # identity: no eye() matmul
            sc = center

        # ---- stage y1 into the zero-margined buffer; zero ONLY the margins ----
        pad_ref[pl.ds(0, MPAD), :] = jnp.zeros((MPAD, Cout), pad_ref.dtype)
        pad_ref[pl.ds(MPAD + HW, MPAD), :] = jnp.zeros((MPAD, Cout), pad_ref.dtype)
        pad_ref[pl.ds(MPAD, HW), :] = y1

        # ---- conv2 (+ folded BN2), residual add, ReLU ----
        y2 = conv(lambda si, sh: pad_ref[pl.ds(MPAD + sh, HW), :],
                  plan2, w2_ref, lout, rout, fuse2) + b2_ref[...]
        out_ref[...] = jnp.maximum(y2 + sc, 0.0).astype(out_ref.dtype)

    return kernel


def basic_block(x, p, *, stride=1):
    """BasicBlock forward.  x: (B, Cin, H, W) NCHW float32; returns NCHW."""
    B, Cin, H, W = x.shape
    Cout = p["w1"].shape[0]
    has_proj = "wsc" in p
    assert has_proj or (stride == 1 and Cin == Cout)

    Hout = (H - 1) // stride + 1
    Wout = (W - 1) // stride + 1
    HW = Hout * Wout
    assert HW % 8 == 0 and Wout >= 2, "kernel assumes (Hout*Wout) % 8 == 0"
    MPAD = ((Wout + 1 + 7) // 8) * 8          # zero row-margin, covers |shift| <= Wout+1
    HWP = HW + 2 * MPAD                       # rows per (image, parity-slab), % 8 == 0
    S = stride * stride                       # parity slabs: 1 (stride 1) or 4 (stride 2)
    M = B * HW

    # ---- host prep: NCHW -> NHWC, stride-parity split, per-slab zero row-margins ----
    xh = jnp.transpose(x, (0, 2, 3, 1)).astype(jnp.float32)
    xh = jnp.pad(xh, ((0, 0), (0, stride * Hout - H), (0, stride * Wout - W), (0, 0)))
    slab_list = []
    for rh in range(stride):
        for rw in range(stride):
            sl = xh[:, rh::stride, rw::stride, :].reshape(B, HW, Cin)
            slab_list.append(jnp.pad(sl, ((0, 0), (MPAD, MPAD), (0, 0))))
    slabs = jnp.concatenate(slab_list, axis=1).reshape(B * S * HWP, Cin)

    # ---- fold eval-mode BatchNorm into the conv weights / biases ----
    def bn_scale_shift(pre):
        scale = p[f"{pre}_g"] / jnp.sqrt(p[f"{pre}_v"] + BN_EPS)
        return scale, p[f"{pre}_b"] - p[f"{pre}_m"] * scale

    fuse1 = Cin % 128 == 0                    # lane-aligned -> single fused-K matmul
    fuse2 = Cout % 128 == 0

    s1, t1 = bn_scale_shift("bn1")
    w1f = jnp.concatenate([p["w1"][:, :, dh + 1, dw + 1].T for dh, dw in TAPS],
                          axis=0) * s1[None, :]
    w1f = w1f.astype(jnp.bfloat16)                       # (9*Cin, Cout)
    b1f = t1[None, :].astype(jnp.float32)                # (1, Cout)

    s2, t2 = bn_scale_shift("bn2")
    w2f = jnp.concatenate([p["w2"][:, :, dh + 1, dw + 1].T for dh, dw in TAPS],
                          axis=0) * s2[None, :]
    w2f = w2f.astype(jnp.bfloat16)                       # (9*Cout, Cout)
    b2f = t2[None, :].astype(jnp.float32)

    if has_proj:
        ssc, tsc = bn_scale_shift("bnsc")
        wscf = (p["wsc"][:, :, 0, 0].T * ssc[None, :]).astype(jnp.bfloat16)
        bscf = tsc[None, :].astype(jnp.float32)

    # Non-fused path indexes weights per tap -> give it a (9, C, Cout) layout.
    w1f = w1f if fuse1 else w1f.reshape(9, Cin, Cout)
    w2f = w2f if fuse2 else w2f.reshape(9, Cout, Cout)

    plan1 = _tap_plan(stride, Wout)
    kernel = _make_kernel(Hout, Wout, Cin, Cout, HWP, MPAD, plan1,
                          has_proj, fuse1, fuse2)

    full2 = lambda b: (0, 0)
    full3 = lambda b: (0, 0, 0)
    w1_spec = (pl.BlockSpec((9 * Cin, Cout), full2) if fuse1
               else pl.BlockSpec((9, Cin, Cout), full3))
    w2_spec = (pl.BlockSpec((9 * Cout, Cout), full2) if fuse2
               else pl.BlockSpec((9, Cout, Cout), full3))

    in_specs = [pl.BlockSpec((S * HWP, Cin), lambda b: (b, 0)),   # activation slabs
                w1_spec,                                          # conv1 (+bn1) weights
                pl.BlockSpec((1, Cout), full2)]                   # conv1 (+bn1) bias
    args = [slabs, w1f, b1f]
    if has_proj:
        in_specs += [pl.BlockSpec((Cin, Cout), full2),            # folded 1x1 shortcut
                     pl.BlockSpec((1, Cout), full2)]
        args += [wscf, bscf]
    in_specs += [w2_spec, pl.BlockSpec((1, Cout), full2)]         # conv2 (+bn2)
    args += [w2f, b2f]

    flops = 2 * M * Cout * (9 * Cin + 9 * Cout + (Cin if has_proj else 0))
    bytes_accessed = int(sum(int(a.size) * a.dtype.itemsize for a in args)
                         + M * Cout * 4)

    out_flat = pl.pallas_call(
        kernel,
        grid=(B,),                                    # one grid step per batch image
        out_shape=jax.ShapeDtypeStruct((M, Cout), jnp.float32),
        in_specs=in_specs,
        out_specs=pl.BlockSpec((HW, Cout), lambda b: (b, 0)),
        scratch_shapes=[pltpu.VMEM((HWP, Cout), jnp.float32)],    # margined y1 staging
        compiler_params=pltpu.CompilerParams(
            dimension_semantics=("parallel",),
            vmem_limit_bytes=48 * 1024 * 1024),       # explicit; below v7x 64 MiB phys
        cost_estimate=pl.CostEstimate(flops=flops, transcendentals=0,
                                      bytes_accessed=bytes_accessed),
    )(*args)

    return jnp.transpose(out_flat.reshape(B, Hout, Wout, Cout), (0, 3, 1, 2))


def reference_forward(x, p, *, stride):
    """Pure-JAX reference (eval-mode BasicBlock, matches PyTorch semantics)."""
    dn = ("NHWC", "HWIO", "NHWC")
    hi = jax.lax.Precision.HIGHEST

    def conv(xh, w, s, pad):
        return jax.lax.conv_general_dilated(
            xh, jnp.transpose(w, (2, 3, 1, 0)), window_strides=(s, s),
            padding=pad, dimension_numbers=dn, precision=hi)

    def bn(xh, pre):
        return ((xh - p[f"{pre}_m"]) / jnp.sqrt(p[f"{pre}_v"] + BN_EPS)
                * p[f"{pre}_g"] + p[f"{pre}_b"])

    xh = jnp.transpose(x, (0, 2, 3, 1))
    out = jax.nn.relu(bn(conv(xh, p["w1"], stride, ((1, 1), (1, 1))), "bn1"))
    out = bn(conv(out, p["w2"], 1, ((1, 1), (1, 1))), "bn2")
    if "wsc" in p:
        sc = bn(conv(xh, p["wsc"], stride, ((0, 0), (0, 0))), "bnsc")
    else:
        sc = xh
    return jnp.transpose(jax.nn.relu(out + sc), (0, 3, 1, 2))


def init_params(key, cin, cout, *, projection):
    """Deterministic synthetic BasicBlock parameters (eval-mode BN stats)."""
    it = iter(jax.random.split(key, 20))

    def nrm(shape, s=1.0):
        return jax.random.normal(next(it), shape, jnp.float32) * s

    p = {"w1": nrm((cout, cin, 3, 3), 0.2), "w2": nrm((cout, cout, 3, 3), 0.2)}

    def bn(prefix):
        p[f"{prefix}_g"] = 1.0 + 0.1 * nrm((cout,))
        p[f"{prefix}_b"] = 0.1 * nrm((cout,))
        p[f"{prefix}_m"] = 0.1 * nrm((cout,))
        p[f"{prefix}_v"] = 0.5 + 0.5 * jnp.abs(nrm((cout,)))

    bn("bn1"); bn("bn2")
    if projection:
        p["wsc"] = nrm((cout, cin, 1, 1), 0.2)
        bn("bnsc")
    return p


if __name__ == "__main__":
    key = jax.random.PRNGKey(0)
    k1, k2, k3, k4 = jax.random.split(key, 4)
    fwd = jax.jit(basic_block, static_argnames=("stride",))

    # bf16 MXU operands vs. the f32 HIGHEST-precision reference -> loosen tolerances.
    RTOL, ATOL = 5e-2, 1e-1

    # Config A: projection shortcut (stride=2, 4 -> 8 channels), 16x16 input.
    B, Cin, Cout, H, W, stride = 2, 4, 8, 16, 16, 2
    x = jax.random.normal(k1, (B, Cin, H, W), jnp.float32)
    params = init_params(k2, Cin, Cout, projection=True)
    out = jax.block_until_ready(fwd(x, params, stride=stride))
    ref = reference_forward(x, params, stride=stride)
    assert out.shape == (B, Cout, H // stride, W // stride)
    assert bool(jnp.all(jnp.isfinite(out)))
    assert jnp.allclose(out, ref, rtol=RTOL, atol=ATOL), (
        "mismatch (projection): max |d| = %f" % float(jnp.max(jnp.abs(out - ref))))

    # Config B: identity shortcut (stride=1, Cin == Cout = 8), 16x16 input.
    x2 = jax.random.normal(k3, (2, 8, 16, 16), jnp.float32)
    params2 = init_params(k4, 8, 8, projection=False)
    out2 = jax.block_until_ready(fwd(x2, params2, stride=1))
    ref2 = reference_forward(x2, params2, stride=1)
    assert out2.shape == (2, 8, 16, 16)
    assert bool(jnp.all(jnp.isfinite(out2)))
    assert jnp.allclose(out2, ref2, rtol=RTOL, atol=ATOL), (
        "mismatch (identity): max |d| = %f" % float(jnp.max(jnp.abs(out2 - ref2))))

    print("KERNEL_OK")
</pallas_src>

<mosaic_0001>
module attributes {stable_mosaic.version = 11 : i64} {
  func.func @kernel(%arg0: i32, %arg1: memref<384x4xf32, #tpu.memory_space<vmem>>, %arg2: memref<9x4x8xbf16, #tpu.memory_space<vmem>>, %arg3: memref<1x8xf32, #tpu.memory_space<vmem>>, %arg4: memref<4x8xbf16, #tpu.memory_space<vmem>>, %arg5: memref<1x8xf32, #tpu.memory_space<vmem>>, %arg6: memref<9x8x8xbf16, #tpu.memory_space<vmem>>, %arg7: memref<1x8xf32, #tpu.memory_space<vmem>>, %arg8: memref<64x8xf32, #tpu.memory_space<vmem>>, %arg9: memref<96x8xf32, #tpu.memory_space<vmem>>) attributes {dimension_semantics = [#tpu.dimension_semantics<parallel>], iteration_bounds = array<i64: 2>, scalar_prefetch = 0 : i64, scratch_operands = 1 : i64, tpu.core_type = #tpu.core_type<tc>, window_params = [{transform_indices = @transform_0, window_bounds = array<i64: 384, 4>}, {pipeline_mode = #tpu.pipeline_mode<synchronous>, transform_indices = @transform_1, window_bounds = array<i64: 9, 4, 8>}, {pipeline_mode = #tpu.pipeline_mode<synchronous>, transform_indices = @transform_2, window_bounds = array<i64: 1, 8>}, {pipeline_mode = #tpu.pipeline_mode<synchronous>, transform_indices = @transform_3, window_bounds = array<i64: 4, 8>}, {pipeline_mode = #tpu.pipeline_mode<synchronous>, transform_indices = @transform_4, window_bounds = array<i64: 1, 8>}, {pipeline_mode = #tpu.pipeline_mode<synchronous>, transform_indices = @transform_5, window_bounds = array<i64: 9, 8, 8>}, {pipeline_mode = #tpu.pipeline_mode<synchronous>, transform_indices = @transform_6, window_bounds = array<i64: 1, 8>}, {transform_indices = @transform_7, window_bounds = array<i64: 64, 8>}]} {
    %0 = tpu.iota {dimensions = array<i32: 0>} : vector<64x4xi32>
    %c8_i32 = arith.constant 8 : i32
    %c0_i32 = arith.constant 0 : i32
    %1 = arith.cmpi eq, %c8_i32, %c0_i32 : i32
    %c1_i32 = arith.constant 1 : i32
    %2 = arith.select %1, %c1_i32, %c8_i32 : i32
    %3 = vector.broadcast %2 : i32 to vector<64x4xi32>
    %4 = arith.remsi %0, %3 : vector<64x4xi32>
    %c0_i32_0 = arith.constant 0 : i32
    %5 = vector.broadcast %c0_i32_0 : i32 to vector<64x4xi32>
    %6 = arith.cmpi ne, %4, %5 : vector<64x4xi32>
    %c0_i32_1 = arith.constant 0 : i32
    %7 = vector.broadcast %c0_i32_1 : i32 to vector<64x4xi32>
    %8 = arith.cmpi slt, %4, %7 : vector<64x4xi32>
    %c0_i32_2 = arith.constant 0 : i32
    %9 = arith.cmpi slt, %2, %c0_i32_2 : i32
    %10 = vector.broadcast %9 : i1 to vector<64x4xi1>
    %11 = vector.broadcast %10 : vector<64x4xi1> to vector<64x4xi1>
    %12 = arith.xori %8, %11 : vector<64x4xi1>
    %13 = arith.andi %12, %6 : vector<64x4xi1>
    %14 = vector.broadcast %2 : i32 to vector<64x4xi32>
    %15 = arith.addi %4, %14 : vector<64x4xi32>
    %16 = arith.select %13, %15, %4 : vector<64x4xi1>, vector<64x4xi32>
    %c1_i32_3 = arith.constant 1 : i32
    %17 = vector.broadcast %c1_i32_3 : i32 to vector<64x4xi32>
    %18 = arith.cmpi sge, %16, %17 : vector<64x4xi32>
    %19 = tpu.iota {dimensions = array<i32: 0>} : vector<64x8xi32>
    %c8_i32_4 = arith.constant 8 : i32
    %c0_i32_5 = arith.constant 0 : i32
    %20 = arith.cmpi eq, %c8_i32_4, %c0_i32_5 : i32
    %c1_i32_6 = arith.constant 1 : i32
    %21 = arith.select %20, %c1_i32_6, %c8_i32_4 : i32
    %22 = vector.broadcast %21 : i32 to vector<64x8xi32>
    %23 = arith.remsi %19, %22 : vector<64x8xi32>
    %c0_i32_7 = arith.constant 0 : i32
    %24 = vector.broadcast %c0_i32_7 : i32 to vector<64x8xi32>
    %25 = arith.cmpi ne, %23, %24 : vector<64x8xi32>
    %c0_i32_8 = arith.constant 0 : i32
    %26 = vector.broadcast %c0_i32_8 : i32 to vector<64x8xi32>
    %27 = arith.cmpi slt, %23, %26 : vector<64x8xi32>
    %c0_i32_9 = arith.constant 0 : i32
    %28 = arith.cmpi slt, %21, %c0_i32_9 : i32
    %29 = vector.broadcast %28 : i1 to vector<64x8xi1>
    %30 = vector.broadcast %29 : vector<64x8xi1> to vector<64x8xi1>
    %31 = arith.xori %27, %30 : vector<64x8xi1>
    %32 = arith.andi %31, %25 : vector<64x8xi1>
    %33 = vector.broadcast %21 : i32 to vector<64x8xi32>
    %34 = arith.addi %23, %33 : vector<64x8xi32>
    %35 = arith.select %32, %34, %23 : vector<64x8xi1>, vector<64x8xi32>
    %c1_i32_10 = arith.constant 1 : i32
    %36 = vector.broadcast %c1_i32_10 : i32 to vector<64x8xi32>
    %37 = arith.cmpi sge, %35, %36 : vector<64x8xi32>
    %c6_i32 = arith.constant 6 : i32
    %38 = vector.broadcast %c6_i32 : i32 to vector<64x8xi32>
    %39 = arith.cmpi sle, %35, %38 : vector<64x8xi32>
    %c295 = arith.constant 295 : index
    %c0 = arith.constant 0 : index
    %40 = vector.load %arg1[%c295, %c0] : memref<384x4xf32, #tpu.memory_space<vmem>>, vector<64x4xf32>
    %cst = arith.constant 0.000000e+00 : f32
    %41 = vector.broadcast %cst : f32 to vector<64x4xf32>
    %42 = arith.select %18, %40, %41 : vector<64x4xi1>, vector<64x4xf32>
    %43 = arith.truncf %42 : vector<64x4xf32> to vector<64x4xbf16>
    %c200 = arith.constant 200 : index
    %c0_11 = arith.constant 0 : index
    %44 = vector.load %arg1[%c200, %c0_11] : memref<384x4xf32, #tpu.memory_space<vmem>>, vector<64x4xf32>
    %45 = arith.truncf %44 : vector<64x4xf32> to vector<64x4xbf16>
    %c296 = arith.constant 296 : index
    %c0_12 = arith.constant 0 : index
    %46 = vector.load %arg1[%c296, %c0_12] : memref<384x4xf32, #tpu.memory_space<vmem>>, vector<64x4xf32>
    %47 = arith.truncf %46 : vector<64x4xf32> to vector<64x4xbf16>
    %c111 = arith.constant 111 : index
    %c0_13 = arith.constant 0 : index
    %48 = vector.load %arg1[%c111, %c0_13] : memref<384x4xf32, #tpu.memory_space<vmem>>, vector<64x4xf32>
    %cst_14 = arith.constant 0.000000e+00 : f32
    %49 = vector.broadcast %cst_14 : f32 to vector<64x4xf32>
    %50 = arith.select %18, %48, %49 : vector<64x4xi1>, vector<64x4xf32>
    %51 = arith.truncf %50 : vector<64x4xf32> to vector<64x4xbf16>
    %c16 = arith.constant 16 : index
    %c0_15 = arith.constant 0 : index
    %52 = vector.load %arg1[%c16, %c0_15] : memref<384x4xf32, #tpu.memory_space<vmem>>, vector<64x4xf32>
    %53 = arith.truncf %52 : vector<64x4xf32> to vector<64x4xbf16>
    %c112 = arith.constant 112 : index
    %c0_16 = arith.constant 0 : index
    %54 = vector.load %arg1[%c112, %c0_16] : memref<384x4xf32, #tpu.memory_space<vmem>>, vector<64x4xf32>
    %55 = arith.truncf %54 : vector<64x4xf32> to vector<64x4xbf16>
    %c303 = arith.constant 303 : index
    %c0_17 = arith.constant 0 : index
    %56 = vector.load %arg1[%c303, %c0_17] : memref<384x4xf32, #tpu.memory_space<vmem>>, vector<64x4xf32>
    %cst_18 = arith.constant 0.000000e+00 : f32
    %57 = vector.broadcast %cst_18 : f32 to vector<64x4xf32>
    %58 = arith.select %18, %56, %57 : vector<64x4xi1>, vector<64x4xf32>
    %59 = arith.truncf %58 : vector<64x4xf32> to vector<64x4xbf16>
    %c208 = arith.constant 208 : index
    %c0_19 = arith.constant 0 : index
    %60 = vector.load %arg1[%c208, %c0_19] : memref<384x4xf32, #tpu.memory_space<vmem>>, vector<64x4xf32>
    %61 = arith.truncf %60 : vector<64x4xf32> to vector<64x4xbf16>
    %c304 = arith.constant 304 : index
    %c0_20 = arith.constant 0 : index
    %62 = vector.load %arg1[%c304, %c0_20] : memref<384x4xf32, #tpu.memory_space<vmem>>, vector<64x4xf32>
    %63 = arith.truncf %62 : vector<64x4xf32> to vector<64x4xbf16>
    %cst_21 = arith.constant 0.000000e+00 : f32
    %64 = vector.broadcast %cst_21 : f32 to vector<64x8xf32>
    %c0_22 = arith.constant 0 : index
    %c0_23 = arith.constant 0 : index
    %c0_24 = arith.constant 0 : index
    %65 = vector.load %arg2[%c0_22, %c0_23, %c0_24] : memref<9x4x8xbf16, #tpu.memory_space<vmem>>, vector<1x4x8xbf16>
    %66 = vector.shape_cast %65 : vector<1x4x8xbf16> to vector<4x8xbf16>
    %cst_25 = arith.constant dense<0.000000e+00> : vector<64x8xf32>
    %67 = tpu.matmul %43, %66, %cst_25 {dimension_numbers = #tpu.dot_dimension_numbers<[1], [0], [0], [1], [0, 0, 1, 1], [], []>} : vector<64x4xbf16>, vector<4x8xbf16>, vector<64x8xf32> -> vector<64x8xf32>
    %68 = arith.addf %64, %67 : vector<64x8xf32>
    %c1 = arith.constant 1 : index
    %c0_26 = arith.constant 0 : index
    %c0_27 = arith.constant 0 : index
    %69 = vector.load %arg2[%c1, %c0_26, %c0_27] : memref<9x4x8xbf16, #tpu.memory_space<vmem>>, vector<1x4x8xbf16>
    %70 = vector.shape_cast %69 : vector<1x4x8xbf16> to vector<4x8xbf16>
    %cst_28 = arith.constant dense<0.000000e+00> : vector<64x8xf32>
    %71 = tpu.matmul %45, %70, %cst_28 {dimension_numbers = #tpu.dot_dimension_numbers<[1], [0], [0], [1], [0, 0, 1, 1], [], []>} : vector<64x4xbf16>, vector<4x8xbf16>, vector<64x8xf32> -> vector<64x8xf32>
    %72 = arith.addf %68, %71 : vector<64x8xf32>
    %c2 = arith.constant 2 : index
    %c0_29 = arith.constant 0 : index
    %c0_30 = arith.constant 0 : index
    %73 = vector.load %arg2[%c2, %c0_29, %c0_30] : memref<9x4x8xbf16, #tpu.memory_space<vmem>>, vector<1x4x8xbf16>
    %74 = vector.shape_cast %73 : vector<1x4x8xbf16> to vector<4x8xbf16>
    %cst_31 = arith.constant dense<0.000000e+00> : vector<64x8xf32>
    %75 = tpu.matmul %47, %74, %cst_31 {dimension_numbers = #tpu.dot_dimension_numbers<[1], [0], [0], [1], [0, 0, 1, 1], [], []>} : vector<64x4xbf16>, vector<4x8xbf16>, vector<64x8xf32> -> vector<64x8xf32>
    %76 = arith.addf %72, %75 : vector<64x8xf32>
    %c3 = arith.constant 3 : index
    %c0_32 = arith.constant 0 : index
    %c0_33 = arith.constant 0 : index
    %77 = vector.load %arg2[%c3, %c0_32, %c0_33] : memref<9x4x8xbf16, #tpu.memory_space<vmem>>, vector<1x4x8xbf16>
    %78 = vector.shape_cast %77 : vector<1x4x8xbf16> to vector<4x8xbf16>
    %cst_34 = arith.constant dense<0.000000e+00> : vector<64x8xf32>
    %79 = tpu.matmul %51, %78, %cst_34 {dimension_numbers = #tpu.dot_dimension_numbers<[1], [0], [0], [1], [0, 0, 1, 1], [], []>} : vector<64x4xbf16>, vector<4x8xbf16>, vector<64x8xf32> -> vector<64x8xf32>
    %80 = arith.addf %76, %79 : vector<64x8xf32>
    %c4 = arith.constant 4 : index
    %c0_35 = arith.constant 0 : index
    %c0_36 = arith.constant 0 : index
    %81 = vector.load %arg2[%c4, %c0_35, %c0_36] : memref<9x4x8xbf16, #tpu.memory_space<vmem>>, vector<1x4x8xbf16>
    %82 = vector.shape_cast %81 : vector<1x4x8xbf16> to vector<4x8xbf16>
    %cst_37 = arith.constant dense<0.000000e+00> : vector<64x8xf32>
    %83 = tpu.matmul %53, %82, %cst_37 {dimension_numbers = #tpu.dot_dimension_numbers<[1], [0], [0], [1], [0, 0, 1, 1], [], []>} : vector<64x4xbf16>, vector<4x8xbf16>, vector<64x8xf32> -> vector<64x8xf32>
    %84 = arith.addf %80, %83 : vector<64x8xf32>
    %c5 = arith.constant 5 : index
    %c0_38 = arith.constant 0 : index
    %c0_39 = arith.constant 0 : index
    %85 = vector.load %arg2[%c5, %c0_38, %c0_39] : memref<9x4x8xbf16, #tpu.memory_space<vmem>>, vector<1x4x8xbf16>
    %86 = vector.shape_cast %85 : vector<1x4x8xbf16> to vector<4x8xbf16>
    %cst_40 = arith.constant dense<0.000000e+00> : vector<64x8xf32>
    %87 = tpu.matmul %55, %86, %cst_40 {dimension_numbers = #tpu.dot_dimension_numbers<[1], [0], [0], [1], [0, 0, 1, 1], [], []>} : vector<64x4xbf16>, vector<4x8xbf16>, vector<64x8xf32> -> vector<64x8xf32>
    %88 = arith.addf %84, %87 : vector<64x8xf32>
    %c6 = arith.constant 6 : index
    %c0_41 = arith.constant 0 : index
    %c0_42 = arith.constant 0 : index
    %89 = vector.load %arg2[%c6, %c0_41, %c0_42] : memref<9x4x8xbf16, #tpu.memory_space<vmem>>, vector<1x4x8xbf16>
    %90 = vector.shape_cast %89 : vector<1x4x8xbf16> to vector<4x8xbf16>
    %cst_43 = arith.constant dense<0.000000e+00> : vector<64x8xf32>
    %91 = tpu.matmul %59, %90, %cst_43 {dimension_numbers = #tpu.dot_dimension_numbers<[1], [0], [0], [1], [0, 0, 1, 1], [], []>} : vector<64x4xbf16>, vector<4x8xbf16>, vector<64x8xf32> -> vector<64x8xf32>
    %92 = arith.addf %88, %91 : vector<64x8xf32>
    %c7 = arith.constant 7 : index
    %c0_44 = arith.constant 0 : index
    %c0_45 = arith.constant 0 : index
    %93 = vector.load %arg2[%c7, %c0_44, %c0_45] : memref<9x4x8xbf16, #tpu.memory_space<vmem>>, vector<1x4x8xbf16>
    %94 = vector.shape_cast %93 : vector<1x4x8xbf16> to vector<4x8xbf16>
    %cst_46 = arith.constant dense<0.000000e+00> : vector<64x8xf32>
    %95 = tpu.matmul %61, %94, %cst_46 {dimension_numbers = #tpu.dot_dimension_numbers<[1], [0], [0], [1], [0, 0, 1, 1], [], []>} : vector<64x4xbf16>, vector<4x8xbf16>, vector<64x8xf32> -> vector<64x8xf32>
    %96 = arith.addf %92, %95 : vector<64x8xf32>
    %c8 = arith.constant 8 : index
    %c0_47 = arith.constant 0 : index
    %c0_48 = arith.constant 0 : index
    %97 = vector.load %arg2[%c8, %c0_47, %c0_48] : memref<9x4x8xbf16, #tpu.memory_space<vmem>>, vector<1x4x8xbf16>
    %98 = vector.shape_cast %97 : vector<1x4x8xbf16> to vector<4x8xbf16>
    %cst_49 = arith.constant dense<0.000000e+00> : vector<64x8xf32>
    %99 = tpu.matmul %63, %98, %cst_49 {dimension_numbers = #tpu.dot_dimension_numbers<[1], [0], [0], [1], [0, 0, 1, 1], [], []>} : vector<64x4xbf16>, vector<4x8xbf16>, vector<64x8xf32> -> vector<64x8xf32>
    %100 = arith.addf %96, %99 : vector<64x8xf32>
    %c0_50 = arith.constant 0 : index
    %c0_51 = arith.constant 0 : index
    %101 = vector.load %arg3[%c0_50, %c0_51] : memref<1x8xf32, #tpu.memory_space<vmem>>, vector<1x8xf32>
    %102 = vector.broadcast %101 : vector<1x8xf32> to vector<64x8xf32>
    %103 = arith.addf %100, %102 : vector<64x8xf32>
    %cst_52 = arith.constant 0.000000e+00 : f32
    %104 = vector.broadcast %cst_52 : f32 to vector<64x8xf32>
    %105 = arith.maximumf %103, %104 : vector<64x8xf32>
    %c16_53 = arith.constant 16 : index
    %c0_54 = arith.constant 0 : index
    %106 = vector.load %arg1[%c16_53, %c0_54] : memref<384x4xf32, #tpu.memory_space<vmem>>, vector<64x4xf32>
    %107 = arith.truncf %106 : vector<64x4xf32> to vector<64x4xbf16>
    %c0_55 = arith.constant 0 : index
    %c0_56 = arith.constant 0 : index
    %108 = vector.load %arg4[%c0_55, %c0_56] : memref<4x8xbf16, #tpu.memory_space<vmem>>, vector<4x8xbf16>
    %cst_57 = arith.constant dense<0.000000e+00> : vector<64x8xf32>
    %109 = tpu.matmul %107, %108, %cst_57 {dimension_numbers = #tpu.dot_dimension_numbers<[1], [0], [0], [1], [0, 0, 1, 1], [], []>} : vector<64x4xbf16>, vector<4x8xbf16>, vector<64x8xf32> -> vector<64x8xf32>
    %c0_58 = arith.constant 0 : index
    %c0_59 = arith.constant 0 : index
    %110 = vector.load %arg5[%c0_58, %c0_59] : memref<1x8xf32, #tpu.memory_space<vmem>>, vector<1x8xf32>
    %111 = vector.broadcast %110 : vector<1x8xf32> to vector<64x8xf32>
    %112 = arith.addf %109, %111 : vector<64x8xf32>
    %cst_60 = arith.constant 0.000000e+00 : f32
    %113 = vector.broadcast %cst_60 : f32 to vector<16x8xf32>
    %c0_61 = arith.constant 0 : index
    %c0_62 = arith.constant 0 : index
    %114 = vector.load %arg9[%c0_61, %c0_62] : memref<96x8xf32, #tpu.memory_space<vmem>>, vector<16x8xf32>
    tpu.vector_store %arg9[%c0_61, %c0_62], %113 {strides = array<i32>} : memref<96x8xf32, #tpu.memory_space<vmem>>, vector<16x8xf32>,
    %cst_63 = arith.constant 0.000000e+00 : f32
    %115 = vector.broadcast %cst_63 : f32 to vector<16x8xf32>
    %c80 = arith.constant 80 : index
    %c0_64 = arith.constant 0 : index
    %116 = vector.load %arg9[%c80, %c0_64] : memref<96x8xf32, #tpu.memory_space<vmem>>, vector<16x8xf32>
    tpu.vector_store %arg9[%c80, %c0_64], %115 {strides = array<i32>} : memref<96x8xf32, #tpu.memory_space<vmem>>, vector<16x8xf32>,
    %c16_65 = arith.constant 16 : index
    %c0_66 = arith.constant 0 : index
    %117 = vector.load %arg9[%c16_65, %c0_66] : memref<96x8xf32, #tpu.memory_space<vmem>>, vector<64x8xf32>
    tpu.vector_store %arg9[%c16_65, %c0_66], %105 {strides = array<i32>} : memref<96x8xf32, #tpu.memory_space<vmem>>, vector<64x8xf32>,
    %c7_67 = arith.constant 7 : index
    %c0_68 = arith.constant 0 : index
    %118 = vector.load %arg9[%c7_67, %c0_68] : memref<96x8xf32, #tpu.memory_space<vmem>>, vector<64x8xf32>
    %cst_69 = arith.constant 0.000000e+00 : f32
    %119 = vector.broadcast %cst_69 : f32 to vector<64x8xf32>
    %120 = arith.select %37, %118, %119 : vector<64x8xi1>, vector<64x8xf32>
    %121 = arith.truncf %120 : vector<64x8xf32> to vector<64x8xbf16>
    %c8_70 = arith.constant 8 : index
    %c0_71 = arith.constant 0 : index
    %122 = vector.load %arg9[%c8_70, %c0_71] : memref<96x8xf32, #tpu.memory_space<vmem>>, vector<64x8xf32>
    %123 = arith.truncf %122 : vector<64x8xf32> to vector<64x8xbf16>
    %c9 = arith.constant 9 : index
    %c0_72 = arith.constant 0 : index
    %124 = vector.load %arg9[%c9, %c0_72] : memref<96x8xf32, #tpu.memory_space<vmem>>, vector<64x8xf32>
    %cst_73 = arith.constant 0.000000e+00 : f32
    %125 = vector.broadcast %cst_73 : f32 to vector<64x8xf32>
    %126 = arith.select %39, %124, %125 : vector<64x8xi1>, vector<64x8xf32>
    %127 = arith.truncf %126 : vector<64x8xf32> to vector<64x8xbf16>
    %c15 = arith.constant 15 : index
    %c0_74 = arith.constant 0 : index
    %128 = vector.load %arg9[%c15, %c0_74] : memref<96x8xf32, #tpu.memory_space<vmem>>, vector<64x8xf32>
    %cst_75 = arith.constant 0.000000e+00 : f32
    %129 = vector.broadcast %cst_75 : f32 to vector<64x8xf32>
    %130 = arith.select %37, %128, %129 : vector<64x8xi1>, vector<64x8xf32>
    %131 = arith.truncf %130 : vector<64x8xf32> to vector<64x8xbf16>
    %c16_76 = arith.constant 16 : index
    %c0_77 = arith.constant 0 : index
    %132 = vector.load %arg9[%c16_76, %c0_77] : memref<96x8xf32, #tpu.memory_space<vmem>>, vector<64x8xf32>
    %133 = arith.truncf %132 : vector<64x8xf32> to vector<64x8xbf16>
    %c17 = arith.constant 17 : index
    %c0_78 = arith.constant 0 : index
    %134 = vector.load %arg9[%c17, %c0_78] : memref<96x8xf32, #tpu.memory_space<vmem>>, vector<64x8xf32>
    %cst_79 = arith.constant 0.000000e+00 : f32
    %135 = vector.broadcast %cst_79 : f32 to vector<64x8xf32>
    %136 = arith.select %39, %134, %135 : vector<64x8xi1>, vector<64x8xf32>
    %137 = arith.truncf %136 : vector<64x8xf32> to vector<64x8xbf16>
    %c23 = arith.constant 23 : index
    %c0_80 = arith.constant 0 : index
    %138 = vector.load %arg9[%c23, %c0_80] : memref<96x8xf32, #tpu.memory_space<vmem>>, vector<64x8xf32>
    %cst_81 = arith.constant 0.000000e+00 : f32
    %139 = vector.broadcast %cst_81 : f32 to vector<64x8xf32>
    %140 = arith.select %37, %138, %139 : vector<64x8xi1>, vector<64x8xf32>
    %141 = arith.truncf %140 : vector<64x8xf32> to vector<64x8xbf16>
    %c24 = arith.constant 24 : index
    %c0_82 = arith.constant 0 : index
    %142 = vector.load %arg9[%c24, %c0_82] : memref<96x8xf32, #tpu.memory_space<vmem>>, vector<64x8xf32>
    %143 = arith.truncf %142 : vector<64x8xf32> to vector<64x8xbf16>
    %c25 = arith.constant 25 : index
    %c0_83 = arith.constant 0 : index
    %144 = vector.load %arg9[%c25, %c0_83] : memref<96x8xf32, #tpu.memory_space<vmem>>, vector<64x8xf32>
    %cst_84 = arith.constant 0.000000e+00 : f32
    %145 = vector.broadcast %cst_84 : f32 to vector<64x8xf32>
    %146 = arith.select %39, %144, %145 : vector<64x8xi1>, vector<64x8xf32>
    %147 = arith.truncf %146 : vector<64x8xf32> to vector<64x8xbf16>
    %cst_85 = arith.constant 0.000000e+00 : f32
    %148 = vector.broadcast %cst_85 : f32 to vector<64x8xf32>
    %c0_86 = arith.constant 0 : index
    %c0_87 = arith.constant 0 : index
    %c0_88 = arith.constant 0 : index
    %149 = vector.load %arg6[%c0_86, %c0_87, %c0_88] : memref<9x8x8xbf16, #tpu.memory_space<vmem>>, vector<1x8x8xbf16>
    %150 = vector.shape_cast %149 : vector<1x8x8xbf16> to vector<8x8xbf16>
    %cst_89 = arith.constant dense<0.000000e+00> : vector<64x8xf32>
    %151 = tpu.matmul %121, %150, %cst_89 {dimension_numbers = #tpu.dot_dimension_numbers<[1], [0], [0], [1], [0, 0, 1, 1], [], []>} : vector<64x8xbf16>, vector<8x8xbf16>, vector<64x8xf32> -> vector<64x8xf32>
    %152 = arith.addf %148, %151 : vector<64x8xf32>
    %c1_90 = arith.constant 1 : index
    %c0_91 = arith.constant 0 : index
    %c0_92 = arith.constant 0 : index
    %153 = vector.load %arg6[%c1_90, %c0_91, %c0_92] : memref<9x8x8xbf16, #tpu.memory_space<vmem>>, vector<1x8x8xbf16>
    %154 = vector.shape_cast %153 : vector<1x8x8xbf16> to vector<8x8xbf16>
    %cst_93 = arith.constant dense<0.000000e+00> : vector<64x8xf32>
    %155 = tpu.matmul %123, %154, %cst_93 {dimension_numbers = #tpu.dot_dimension_numbers<[1], [0], [0], [1], [0, 0, 1, 1], [], []>} : vector<64x8xbf16>, vector<8x8xbf16>, vector<64x8xf32> -> vector<64x8xf32>
    %156 = arith.addf %152, %155 : vector<64x8xf32>
    %c2_94 = arith.constant 2 : index
    %c0_95 = arith.constant 0 : index
    %c0_96 = arith.constant 0 : index
    %157 = vector.load %arg6[%c2_94, %c0_95, %c0_96] : memref<9x8x8xbf16, #tpu.memory_space<vmem>>, vector<1x8x8xbf16>
    %158 = vector.shape_cast %157 : vector<1x8x8xbf16> to vector<8x8xbf16>
    %cst_97 = arith.constant dense<0.000000e+00> : vector<64x8xf32>
    %159 = tpu.matmul %127, %158, %cst_97 {dimension_numbers = #tpu.dot_dimension_numbers<[1], [0], [0], [1], [0, 0, 1, 1], [], []>} : vector<64x8xbf16>, vector<8x8xbf16>, vector<64x8xf32> -> vector<64x8xf32>
    %160 = arith.addf %156, %159 : vector<64x8xf32>
    %c3_98 = arith.constant 3 : index
    %c0_99 = arith.constant 0 : index
    %c0_100 = arith.constant 0 : index
    %161 = vector.load %arg6[%c3_98, %c0_99, %c0_100] : memref<9x8x8xbf16, #tpu.memory_space<vmem>>, vector<1x8x8xbf16>
    %162 = vector.shape_cast %161 : vector<1x8x8xbf16> to vector<8x8xbf16>
    %cst_101 = arith.constant dense<0.000000e+00> : vector<64x8xf32>
    %163 = tpu.matmul %131, %162, %cst_101 {dimension_numbers = #tpu.dot_dimension_numbers<[1], [0], [0], [1], [0, 0, 1, 1], [], []>} : vector<64x8xbf16>, vector<8x8xbf16>, vector<64x8xf32> -> vector<64x8xf32>
    %164 = arith.addf %160, %163 : vector<64x8xf32>
    %c4_102 = arith.constant 4 : index
    %c0_103 = arith.constant 0 : index
    %c0_104 = arith.constant 0 : index
    %165 = vector.load %arg6[%c4_102, %c0_103, %c0_104] : memref<9x8x8xbf16, #tpu.memory_space<vmem>>, vector<1x8x8xbf16>
    %166 = vector.shape_cast %165 : vector<1x8x8xbf16> to vector<8x8xbf16>
    %cst_105 = arith.constant dense<0.000000e+00> : vector<64x8xf32>
    %167 = tpu.matmul %133, %166, %cst_105 {dimension_numbers = #tpu.dot_dimension_numbers<[1], [0], [0], [1], [0, 0, 1, 1], [], []>} : vector<64x8xbf16>, vector<8x8xbf16>, vector<64x8xf32> -> vector<64x8xf32>
    %168 = arith.addf %164, %167 : vector<64x8xf32>
    %c5_106 = arith.constant 5 : index
    %c0_107 = arith.constant 0 : index
    %c0_108 = arith.constant 0 : index
    %169 = vector.load %arg6[%c5_106, %c0_107, %c0_108] : memref<9x8x8xbf16, #tpu.memory_space<vmem>>, vector<1x8x8xbf16>
    %170 = vector.shape_cast %169 : vector<1x8x8xbf16> to vector<8x8xbf16>
    %cst_109 = arith.constant dense<0.000000e+00> : vector<64x8xf32>
    %171 = tpu.matmul %137, %170, %cst_109 {dimension_numbers = #tpu.dot_dimension_numbers<[1], [0], [0], [1], [0, 0, 1, 1], [], []>} : vector<64x8xbf16>, vector<8x8xbf16>, vector<64x8xf32> -> vector<64x8xf32>
    %172 = arith.addf %168, %171 : vector<64x8xf32>
    %c6_110 = arith.constant 6 : index
    %c0_111 = arith.constant 0 : index
    %c0_112 = arith.constant 0 : index
    %173 = vector.load %arg6[%c6_110, %c0_111, %c0_112] : memref<9x8x8xbf16, #tpu.memory_space<vmem>>, vector<1x8x8xbf16>
    %174 = vector.shape_cast %173 : vector<1x8x8xbf16> to vector<8x8xbf16>
    %cst_113 = arith.constant dense<0.000000e+00> : vector<64x8xf32>
    %175 = tpu.matmul %141, %174, %cst_113 {dimension_numbers = #tpu.dot_dimension_numbers<[1], [0], [0], [1], [0, 0, 1, 1], [], []>} : vector<64x8xbf16>, vector<8x8xbf16>, vector<64x8xf32> -> vector<64x8xf32>
    %176 = arith.addf %172, %175 : vector<64x8xf32>
    %c7_114 = arith.constant 7 : index
    %c0_115 = arith.constant 0 : index
    %c0_116 = arith.constant 0 : index
    %177 = vector.load %arg6[%c7_114, %c0_115, %c0_116] : memref<9x8x8xbf16, #tpu.memory_space<vmem>>, vector<1x8x8xbf16>
    %178 = vector.shape_cast %177 : vector<1x8x8xbf16> to vector<8x8xbf16>
    %cst_117 = arith.constant dense<0.000000e+00> : vector<64x8xf32>
    %179 = tpu.matmul %143, %178, %cst_117 {dimension_numbers = #tpu.dot_dimension_numbers<[1], [0], [0], [1], [0, 0, 1, 1], [], []>} : vector<64x8xbf16>, vector<8x8xbf16>, vector<64x8xf32> -> vector<64x8xf32>
    %180 = arith.addf %176, %179 : vector<64x8xf32>
    %c8_118 = arith.constant 8 : index
    %c0_119 = arith.constant 0 : index
    %c0_120 = arith.constant 0 : index
    %181 = vector.load %arg6[%c8_118, %c0_119, %c0_120] : memref<9x8x8xbf16, #tpu.memory_space<vmem>>, vector<1x8x8xbf16>
    %182 = vector.shape_cast %181 : vector<1x8x8xbf16> to vector<8x8xbf16>
    %cst_121 = arith.constant dense<0.000000e+00> : vector<64x8xf32>
    %183 = tpu.matmul %147, %182, %cst_121 {dimension_numbers = #tpu.dot_dimension_numbers<[1], [0], [0], [1], [0, 0, 1, 1], [], []>} : vector<64x8xbf16>, vector<8x8xbf16>, vector<64x8xf32> -> vector<64x8xf32>
    %184 = arith.addf %180, %183 : vector<64x8xf32>
    %c0_122 = arith.constant 0 : index
    %c0_123 = arith.constant 0 : index
    %185 = vector.load %arg7[%c0_122, %c0_123] : memref<1x8xf32, #tpu.memory_space<vmem>>, vector<1x8xf32>
    %186 = vector.broadcast %185 : vector<1x8xf32> to vector<64x8xf32>
    %187 = arith.addf %184, %186 : vector<64x8xf32>
    %188 = arith.addf %187, %112 : vector<64x8xf32>
    %cst_124 = arith.constant 0.000000e+00 : f32
    %189 = vector.broadcast %cst_124 : f32 to vector<64x8xf32>
    %190 = arith.maximumf %188, %189 : vector<64x8xf32>
    %c0_125 = arith.constant 0 : index
    %c0_126 = arith.constant 0 : index
    %191 = vector.load %arg8[%c0_125, %c0_126] : memref<64x8xf32, #tpu.memory_space<vmem>>, vector<64x8xf32>
    tpu.vector_store %arg8[%c0_125, %c0_126], %190 {strides = array<i32>} : memref<64x8xf32, #tpu.memory_space<vmem>>, vector<64x8xf32>,
    return
  }
  func.func @transform_0(%arg0: i32) -> (i32, i32) {
    %c0_i32 = arith.constant 0 : i32
    %c0_i32_0 = arith.constant 0 : i32
    return %arg0, %c0_i32 : i32, i32
  }
  func.func @transform_1(%arg0: i32) -> (i32, i32, i32) {
    %c0_i32 = arith.constant 0 : i32
    %c0_i32_0 = arith.constant 0 : i32
    %c0_i32_1 = arith.constant 0 : i32
    %c0_i32_2 = arith.constant 0 : i32
    return %c0_i32, %c0_i32_0, %c0_i32_1 : i32, i32, i32
  }
  func.func @transform_2(%arg0: i32) -> (i32, i32) {
    %c0_i32 = arith.constant 0 : i32
    %c0_i32_0 = arith.constant 0 : i32
    %c0_i32_1 = arith.constant 0 : i32
    return %c0_i32, %c0_i32_0 : i32, i32
  }
  func.func @transform_3(%arg0: i32) -> (i32, i32) {
    %c0_i32 = arith.constant 0 : i32
    %c0_i32_0 = arith.constant 0 : i32
    %c0_i32_1 = arith.constant 0 : i32
    return %c0_i32, %c0_i32_0 : i32, i32
  }
  func.func @transform_4(%arg0: i32) -> (i32, i32) {
    %c0_i32 = arith.constant 0 : i32
    %c0_i32_0 = arith.constant 0 : i32
    %c0_i32_1 = arith.constant 0 : i32
    return %c0_i32, %c0_i32_0 : i32, i32
  }
  func.func @transform_5(%arg0: i32) -> (i32, i32, i32) {
    %c0_i32 = arith.constant 0 : i32
    %c0_i32_0 = arith.constant 0 : i32
    %c0_i32_1 = arith.constant 0 : i32
    %c0_i32_2 = arith.constant 0 : i32
    return %c0_i32, %c0_i32_0, %c0_i32_1 : i32, i32, i32
  }
  func.func @transform_6(%arg0: i32) -> (i32, i32) {
    %c0_i32 = arith.constant 0 : i32
    %c0_i32_0 = arith.constant 0 : i32
    %c0_i32_1 = arith.constant 0 : i32
    return %c0_i32, %c0_i32_0 : i32, i32
  }
  func.func @transform_7(%arg0: i32) -> (i32, i32) {
    %c0_i32 = arith.constant 0 : i32
    %c0_i32_0 = arith.constant 0 : i32
    return %arg0, %c0_i32 : i32, i32
  }
}

</mosaic_0001>

<llo_original>
// kernel: basic_block.1
$region0: #{basic_block.1}
  #allocation0 [shape = 'u32[]', space=smem, size = 0x4, offset = 0x4, fixed_abs, tag = 'smem constant byte address 0x4 - core index']
  #allocation1 [shape = 'u32[72,128]{1,0:T(1,128)}', space=vmem, size = 0x9000, scoped, tag = 'internal scratch']
  #allocation2 [shape = 'f32[96,8]{1,0:T(8,128)}', space=vmem, size = 0xc000, scoped, tag = 'scratch operand']
  %s0 = inlined_call_operand.vmem [shape: f32[768,4], index: 0, kind: input, shape index: {}]
  %s1 = inlined_call_operand.vmem [shape: bf16[9,4,8], index: 1, kind: input, shape index: {}]
  %s2 = inlined_call_operand.vmem [shape: f32[1,8], index: 2, kind: input, shape index: {}]
  %s3 = inlined_call_operand.vmem [shape: bf16[4,8], index: 3, kind: input, shape index: {}]
  %s4 = inlined_call_operand.vmem [shape: f32[1,8], index: 4, kind: input, shape index: {}]
  %s5 = inlined_call_operand.vmem [shape: bf16[9,8,8], index: 5, kind: input, shape index: {}]
  %s6 = inlined_call_operand.vmem [shape: f32[1,8], index: 6, kind: input, shape index: {}]
  %s7 = inlined_call_operand.vmem [shape: f32[128,8], index: 7, kind: output, shape index: {}]
  %s8 = sld [smem:[#allocation0]]
  $region61: #{basic_block.1} parent=0
    _
  %s10 = ssub.s32 1, %s8
  %s11 = scalar_select 0, %s10, %s8
  loop: start=0, step=1, limit=4
  $region2: #{basic_block.1} parent=0 // loop_pre_header
    _
  $region3: #{basic_block.1} parent=0 // loop_header
    %s13 = sphi 0, %s17
    %p14 = scmp.ge.s32.totalorder %s13, 4
    %s23 = sphi 0, %s25
    %s26 = sphi 0, %s23
    %s27 = sphi 0, %s26
    %s43 = sphi 0, %s27
    %s47 = sphi 0, %s47
    %s49 = sphi 0, %s47
    %s50 = sphi 0, %s49
    %s64 = sphi 0, %s50
    %s68 = sphi 0, %s68
    %s70 = sphi 0, %s68
    %s71 = sphi 0, %s70
    %s85 = sphi 0, %s71
    %s89 = sphi 0, %s89
    %s91 = sphi 0, %s89
    %s92 = sphi 0, %s91
    %s106 = sphi 0, %s92
    %s110 = sphi 0, %s110
    %s112 = sphi 0, %s110
    %s113 = sphi 0, %s112
    %s127 = sphi 0, %s113
    %s131 = sphi 0, %s131
    %s133 = sphi 0, %s131
    %s134 = sphi 0, %s133
    %s148 = sphi 0, %s134
    %s152 = sphi 0, %s152
    %s154 = sphi 0, %s152
    %s155 = sphi 0, %s154
    %s169 = sphi 0, %s155
    %s175 = sphi 0, %s177
    %s178 = sphi 0, %s175
    %s179 = sphi 0, %s178
    %s195 = sphi 0, %s179
  $region4: #{basic_block.1} parent=0 // loop_header_branch
    %16 = sbr.rel (%p14) target = $region8
  $region5: #{basic_block.1} parent=0 // loop_body
    %s18 = ssub.s32 %s13, 1
    %s19 = ssub.s32 %s13, 2
    %s20 = sadd.s32 %s13, 1
    %s21 = ssub.s32 %s13, %s20
    %p22 = scmp.eq.s32.totalorder %s21, 0
    %s24 = sadd.s32 %s23, 1
    %s25 = scalar_select %p22, %s23, %s24
    %p28 = pneg %p22
    %p29 = scmp.eq.s32.totalorder %s13, 1
    %p30 = por %p28, %p29
    %p31 = scmp.ne.s32.totalorder %s23, %s26
    %p32 = scmp.eq.s32.totalorder %s13, 0
    %p33 = por %p31, %p32
    %p34 = scmp.ne.s32.totalorder %s23, %s26
    %p35 = scmp.eq.s32.totalorder %s18, 1
    %p36 = por %p34, %p35
    %p37 = scmp.ne.s32.totalorder %s26, %s27
    %p38 = scmp.eq.s32.totalorder %s18, 0
    %p39 = por %p37, %p38
    %p40 = scmp.ne.s32.totalorder %s26, %s27
    %p41 = scmp.eq.s32.totalorder %s19, 1
    %p42 = por %p40, %p41
    %p44 = scmp.ne.s32.totalorder %s27, %s43
    %p45 = scmp.eq.s32.totalorder %s19, 0
    %p46 = por %p44, %p45
    %s48 = sadd.s32 %s47, 1
    %p51 = scmp.eq.s32.totalorder %s13, 1
    %p52 = scmp.ne.s32.totalorder %s47, %s49
    %p53 = scmp.eq.s32.totalorder %s13, 0
    %p54 = por %p52, %p53
    %p55 = scmp.ne.s32.totalorder %s47, %s49
    %p56 = scmp.eq.s32.totalorder %s18, 1
    %p57 = por %p55, %p56
    %p58 = scmp.ne.s32.totalorder %s49, %s50
    %p59 = scmp.eq.s32.totalorder %s18, 0
    %p60 = por %p58, %p59
    %p61 = scmp.ne.s32.totalorder %s49, %s50
    %p62 = scmp.eq.s32.totalorder %s19, 1
    %p63 = por %p61, %p62
    %p65 = scmp.ne.s32.totalorder %s50, %s64
    %p66 = scmp.eq.s32.totalorder %s19, 0
    %p67 = por %p65, %p66
    %s69 = sadd.s32 %s68, 1
    %p72 = scmp.eq.s32.totalorder %s13, 1
    %p73 = scmp.ne.s32.totalorder %s68, %s70
    %p74 = scmp.eq.s32.totalorder %s13, 0
    %p75 = por %p73, %p74
    %p76 = scmp.ne.s32.totalorder %s68, %s70
    %p77 = scmp.eq.s32.totalorder %s18, 1
    %p78 = por %p76, %p77
    %p79 = scmp.ne.s32.totalorder %s70, %s71
    %p80 = scmp.eq.s32.totalorder %s18, 0
    %p81 = por %p79, %p80
    %p82 = scmp.ne.s32.totalorder %s70, %s71
    %p83 = scmp.eq.s32.totalorder %s19, 1
    %p84 = por %p82, %p83
    %p86 = scmp.ne.s32.totalorder %s71, %s85
    %p87 = scmp.eq.s32.totalorder %s19, 0
    %p88 = por %p86, %p87
    %s90 = sadd.s32 %s89, 1
    %p93 = scmp.eq.s32.totalorder %s13, 1
    %p94 = scmp.ne.s32.totalorder %s89, %s91
    %p95 = scmp.eq.s32.totalorder %s13, 0
    %p96 = por %p94, %p95
    %p97 = scmp.ne.s32.totalorder %s89, %s91
    %p98 = scmp.eq.s32.totalorder %s18, 1
    %p99 = por %p97, %p98
    %p100 = scmp.ne.s32.totalorder %s91, %s92
    %p101 = scmp.eq.s32.totalorder %s18, 0
    %p102 = por %p100, %p101
    %p103 = scmp.ne.s32.totalorder %s91, %s92
    %p104 = scmp.eq.s32.totalorder %s19, 1
    %p105 = por %p103, %p104
    %p107 = scmp.ne.s32.totalorder %s92, %s106
    %p108 = scmp.eq.s32.totalorder %s19, 0
    %p109 = por %p107, %p108
    %s111 = sadd.s32 %s110, 1
    %p114 = scmp.eq.s32.totalorder %s13, 1
    %p115 = scmp.ne.s32.totalorder %s110, %s112
    %p116 = scmp.eq.s32.totalorder %s13, 0
    %p117 = por %p115, %p116
    %p118 = scmp.ne.s32.totalorder %s110, %s112
    %p119 = scmp.eq.s32.totalorder %s18, 1
    %p120 = por %p118, %p119
    %p121 = scmp.ne.s32.totalorder %s112, %s113
    %p122 = scmp.eq.s32.totalorder %s18, 0
    %p123 = por %p121, %p122
    %p124 = scmp.ne.s32.totalorder %s112, %s113
    %p125 = scmp.eq.s32.totalorder %s19, 1
    %p126 = por %p124, %p125
    %p128 = scmp.ne.s32.totalorder %s113, %s127
    %p129 = scmp.eq.s32.totalorder %s19, 0
    %p130 = por %p128, %p129
    %s132 = sadd.s32 %s131, 1
    %p135 = scmp.eq.s32.totalorder %s13, 1
    %p136 = scmp.ne.s32.totalorder %s131, %s133
    %p137 = scmp.eq.s32.totalorder %s13, 0
    %p138 = por %p136, %p137
    %p139 = scmp.ne.s32.totalorder %s131, %s133
    %p140 = scmp.eq.s32.totalorder %s18, 1
    %p141 = por %p139, %p140
    %p142 = scmp.ne.s32.totalorder %s133, %s134
    %p143 = scmp.eq.s32.totalorder %s18, 0
    %p144 = por %p142, %p143
    %p145 = scmp.ne.s32.totalorder %s133, %s134
    %p146 = scmp.eq.s32.totalorder %s19, 1
    %p147 = por %p145, %p146
    %p149 = scmp.ne.s32.totalorder %s134, %s148
    %p150 = scmp.eq.s32.totalorder %s19, 0
    %p151 = por %p149, %p150
    %s153 = sadd.s32 %s152, 1
    %p156 = scmp.eq.s32.totalorder %s13, 1
    %p157 = scmp.ne.s32.totalorder %s152, %s154
    %p158 = scmp.eq.s32.totalorder %s13, 0
    %p159 = por %p157, %p158
    %p160 = scmp.ne.s32.totalorder %s152, %s154
    %p161 = scmp.eq.s32.totalorder %s18, 1
    %p162 = por %p160, %p161
    %p163 = scmp.ne.s32.totalorder %s154, %s155
    %p164 = scmp.eq.s32.totalorder %s18, 0
    %p165 = por %p163, %p164
    %p166 = scmp.ne.s32.totalorder %s154, %s155
    %p167 = scmp.eq.s32.totalorder %s19, 1
    %p168 = por %p166, %p167
    %p170 = scmp.ne.s32.totalorder %s155, %s169
    %p171 = scmp.eq.s32.totalorder %s19, 0
    %p172 = por %p170, %p171
    %s173 = ssub.s32 %s13, %s20
    %p174 = scmp.eq.s32.totalorder %s173, 0
    %s176 = sadd.s32 %s175, 1
    %s177 = scalar_select %p174, %s175, %s176
    %p180 = pneg %p174
    %p181 = scmp.eq.s32.totalorder %s13, 1
    %p182 = por %p180, %p181
    %p183 = scmp.ne.s32.totalorder %s175, %s178
    %p184 = scmp.eq.s32.totalorder %s13, 0
    %p185 = por %p183, %p184
    %p186 = scmp.ne.s32.totalorder %s175, %s178
    %p187 = scmp.eq.s32.totalorder %s18, 1
    %p188 = por %p186, %p187
    %p189 = scmp.ne.s32.totalorder %s178, %s179
    %p190 = scmp.eq.s32.totalorder %s18, 0
    %p191 = por %p189, %p190
    %p192 = scmp.ne.s32.totalorder %s178, %s179
    %p193 = scmp.eq.s32.totalorder %s19, 1
    %p194 = por %p192, %p193
    %p196 = scmp.ne.s32.totalorder %s179, %s195
    %p197 = scmp.eq.s32.totalorder %s19, 0
    %p198 = por %p196, %p197
    %p199 = scmp.le.s32.totalorder 1, %s13
    %p200 = scmp.lt.s32.totalorder %s13, 3
    %p201 = pnand %p199, %p200
    %p202 = pneg %p201
    // Predicated region
    $region9: #{basic_block.1} parent=5 // pred_check
      _
    $region10: #{basic_block.1} parent=5 // pred_check_branch
      %204 = sbr.rel (%p201) target = $region12
    $region11: #{basic_block.1} parent=5 // pred_region
      %s205 = ssub.s32 %s13, 1
      // Predicated region
      $region13: #{basic_block.1} parent=11 // pred_check
        %p206 = pneg %p60
      $region14: #{basic_block.1} parent=11 // pred_check_branch
        %208 = sbr.rel (%p206) target = $region16
      $region15: #{basic_block.1} parent=11 // pred_region
        _
      $region16: #{basic_block.1} parent=11 // pred_fallthru
        _
      // Predicated region
      $region17: #{basic_block.1} parent=11 // pred_check
        %p209 = pneg %p81
      $region18: #{basic_block.1} parent=11 // pred_check_branch
        %211 = sbr.rel (%p209) target = $region20
      $region19: #{basic_block.1} parent=11 // pred_region
        _
      $region20: #{basic_block.1} parent=11 // pred_fallthru
        _
      // Predicated region
      $region21: #{basic_block.1} parent=11 // pred_check
        %p212 = pneg %p102
      $region22: #{basic_block.1} parent=11 // pred_check_branch
        %214 = sbr.rel (%p212) target = $region24
      $region23: #{basic_block.1} parent=11 // pred_region
        _
      $region24: #{basic_block.1} parent=11 // pred_fallthru
        _
      // Predicated region
      $region25: #{basic_block.1} parent=11 // pred_check
        %p215 = pneg %p123
      $region26: #{basic_block.1} parent=11 // pred_check_branch
        %217 = sbr.rel (%p215) target = $region28
      $region27: #{basic_block.1} parent=11 // pred_region
        _
      $region28: #{basic_block.1} parent=11 // pred_fallthru
        _
      // Predicated region
      $region29: #{basic_block.1} parent=11 // pred_check
        %p218 = pneg %p144
      $region30: #{basic_block.1} parent=11 // pred_check_branch
        %220 = sbr.rel (%p218) target = $region32
      $region31: #{basic_block.1} parent=11 // pred_region
        _
      $region32: #{basic_block.1} parent=11 // pred_fallthru
        _
      // Predicated region
      $region33: #{basic_block.1} parent=11 // pred_check
        %p221 = pneg %p165
      $region34: #{basic_block.1} parent=11 // pred_check_branch
        %223 = sbr.rel (%p221) target = $region36
      $region35: #{basic_block.1} parent=11 // pred_region
        _
      $region36: #{basic_block.1} parent=11 // pred_fallthru
        _
    $region12: #{basic_block.1} parent=5 // pred_fallthru
      _
    %p224 = scmp.lt.s32.totalorder %s13, 2
    // Predicated region
    $region37: #{basic_block.1} parent=5 // pred_check
      %p225 = pneg %p224
    $region38: #{basic_block.1} parent=5 // pred_check_branch
      %227 = sbr.rel (%p225) target = $region40
    $region39: #{basic_block.1} parent=5 // pred_region
      // Predicated region
      $region41: #{basic_block.1} parent=39 // pred_check
        %p228 = pneg %p33
      $region42: #{basic_block.1} parent=39 // pred_check_branch
        %230 = sbr.rel (%p228) target = $region44
      $region43: #{basic_block.1} parent=39 // pred_region
        %s231 = smul.u32 48, %s13
        %p232 = scmp.lt.s32.totalorder %s231, 95
        %s233 = scalar_select %p232, %s231, 95
        %s234 = smul.addr %s233, 8
        %s235 = scalar_lea.vmem %s0, %s234
        %s236 = smul.u32 48, %s13
      $region44: #{basic_block.1} parent=39 // pred_fallthru
        _
    $region40: #{basic_block.1} parent=5 // pred_fallthru
      _
    %p237 = scmp.le.s32.totalorder 1, %s13
    %p238 = scmp.lt.s32.totalorder %s13, 3
    %p239 = pnand %p237, %p238
    %p240 = pneg %p239
    // Predicated region
    $region45: #{basic_block.1} parent=5 // pred_check
      _
    $region46: #{basic_block.1} parent=5 // pred_check_branch
      %242 = sbr.rel (%p239) target = $region48
    $region47: #{basic_block.1} parent=5 // pred_region
      %s243 = ssub.s32 %s13, 1
      %s244 = smul.u32 48, %s18
      %p245 = scmp.lt.s32.totalorder %s244, 95
      %s246 = scalar_select %p245, %s244, 95
      %s247 = smul.addr %s246, 8
      %s248 = scalar_lea.vmem %s0, %s247
      %p249 = pneg %p39
      %p250 = pneg %p36
      %p251 = pneg %p60
      %p252 = pneg %p57
      %p253 = pneg %p81
      %p254 = pneg %p78
      %p255 = pneg %p102
      %p256 = pneg %p99
      %p257 = pneg %p123
      %p258 = pneg %p120
      %p259 = pneg %p144
      %p260 = pneg %p141
      %p261 = pneg %p165
      %p262 = pneg %p162
      %p263 = pneg %p191
      %p264 = pneg %p188
      %s265 = smul.u32 8, %s18
      %p266 = scmp.lt.s32.totalorder %s265, 15
      %s267 = scalar_select %p266, %s265, 15
      %s268 = smul.addr %s267, 8
      %s269 = scalar_lea.vmem %s7, %s268
      %s270 = smul.u32 48, %s18
      %p271 = scmp.lt.s32.totalorder %s270, 95
      %s272 = scalar_select %p271, %s270, 95
      %s273 = smul.addr %s272, 8
      %s274 = scalar_lea.vmem %s0, %s273
      %s275 = smul.u32 48, %s18
      %s276 = smul.u32 8, %s18
      %p277 = scmp.lt.s32.totalorder %s276, 15
      %s278 = scalar_select %p277, %s276, 15
      %s279 = smul.addr %s278, 8
      %s280 = scalar_lea.vmem %s7, %s279
      %s281 = smul.u32 8, %s18
      %v283 = vlaneseq
      %v284 = vshrl.u32 %v283, 7
      %v285 = vadd.s32 %v284, 8
      %v286 = vadd.s32 %v284, 16
      %v287 = vadd.s32 %v284, 24
      %v288 = vadd.s32 %v284, 32
      %v289 = vadd.s32 %v284, 40
      %v290 = vadd.s32 %v284, 48
      %v291 = vadd.s32 %v284, 56
      %vm292 = vcmp.lt.s32.totalorder %v284, 0
      %v293 = vsub.s32 0, %v284
      %v294 = vsel %vm292, %v293, %v284
      %v295 = vshrl.u32 %v294, 3
      %v296 = vand.u32 %v294, 7
      %v297 = vsub.s32 0, %v296
      %v298 = vsel %vm292, %v297, %v296
      %vm299 = vcmp.lt.s32.totalorder %v285, 0
      %v300 = vsub.s32 0, %v285
      %v301 = vsel %vm299, %v300, %v285
      %v302 = vshrl.u32 %v301, 3
      %v303 = vand.u32 %v301, 7
      %v304 = vsub.s32 0, %v303
      %v305 = vsel %vm299, %v304, %v303
      %vm306 = vcmp.lt.s32.totalorder %v286, 0
      %v307 = vsub.s32 0, %v286
      %v308 = vsel %vm306, %v307, %v286
      %v309 = vshrl.u32 %v308, 3
      %v310 = vand.u32 %v308, 7
      %v311 = vsub.s32 0, %v310
      %v312 = vsel %vm306, %v311, %v310
      %vm313 = vcmp.lt.s32.totalorder %v287, 0
      %v314 = vsub.s32 0, %v287
      %v315 = vsel %vm313, %v314, %v287
      %v316 = vshrl.u32 %v315, 3
      %v317 = vand.u32 %v315, 7
      %v318 = vsub.s32 0, %v317
      %v319 = vsel %vm313, %v318, %v317
      %vm320 = vcmp.lt.s32.totalorder %v288, 0
      %v321 = vsub.s32 0, %v288
      %v322 = vsel %vm320, %v321, %v288
      %v323 = vshrl.u32 %v322, 3
      %v324 = vand.u32 %v322, 7
      %v325 = vsub.s32 0, %v324
      %v326 = vsel %vm320, %v325, %v324
      %vm327 = vcmp.lt.s32.totalorder %v289, 0
      %v328 = vsub.s32 0, %v289
      %v329 = vsel %vm327, %v328, %v289
      %v330 = vshrl.u32 %v329, 3
      %v331 = vand.u32 %v329, 7
      %v332 = vsub.s32 0, %v331
      %v333 = vsel %vm327, %v332, %v331
      %vm334 = vcmp.lt.s32.totalorder %v290, 0
      %v335 = vsub.s32 0, %v290
      %v336 = vsel %vm334, %v335, %v290
      %v337 = vshrl.u32 %v336, 3
      %v338 = vand.u32 %v336, 7
      %v339 = vsub.s32 0, %v338
      %v340 = vsel %vm334, %v339, %v338
      %vm341 = vcmp.lt.s32.totalorder %v291, 0
      %v342 = vsub.s32 0, %v291
      %v343 = vsel %vm341, %v342, %v291
      %v344 = vshrl.u32 %v343, 3
      %v345 = vand.u32 %v343, 7
      %v346 = vsub.s32 0, %v345
      %v347 = vsel %vm341, %v346, %v345
      %vm348 = vcmp.ne.s32.totalorder %v298, 0
      %vm349 = vcmp.ne.s32.totalorder %v305, 0
      %vm350 = vcmp.ne.s32.totalorder %v312, 0
      %vm351 = vcmp.ne.s32.totalorder %v319, 0
      %vm352 = vcmp.ne.s32.totalorder %v326, 0
      %vm353 = vcmp.ne.s32.totalorder %v333, 0
      %vm354 = vcmp.ne.s32.totalorder %v340, 0
      %vm355 = vcmp.ne.s32.totalorder %v347, 0
      %vm356 = vcmp.lt.s32.totalorder %v298, 0
      %vm357 = vcmp.lt.s32.totalorder %v305, 0
      %vm358 = vcmp.lt.s32.totalorder %v312, 0
      %vm359 = vcmp.lt.s32.totalorder %v319, 0
      %vm360 = vcmp.lt.s32.totalorder %v326, 0
      %vm361 = vcmp.lt.s32.totalorder %v333, 0
      %vm362 = vcmp.lt.s32.totalorder %v340, 0
      %vm363 = vcmp.lt.s32.totalorder %v347, 0
      %vm364 = vmand %vm356, %vm348
      %vm365 = vmand %vm357, %vm349
      %vm366 = vmand %vm358, %vm350
      %vm367 = vmand %vm359, %vm351
      %vm368 = vmand %vm360, %vm352
      %vm369 = vmand %vm361, %vm353
      %vm370 = vmand %vm362, %vm354
      %vm371 = vmand %vm363, %vm355
      %v372 = vadd.s32 %v298, 8
      %v373 = vadd.s32 %v305, 8
      %v374 = vadd.s32 %v312, 8
      %v375 = vadd.s32 %v319, 8
      %v376 = vadd.s32 %v326, 8
      %v377 = vadd.s32 %v333, 8
      %v378 = vadd.s32 %v340, 8
      %v379 = vadd.s32 %v347, 8
      %v380 = vsel %vm364, %v372, %v298
      %v381 = vsel %vm365, %v373, %v305
      %v382 = vsel %vm366, %v374, %v312
      %v383 = vsel %vm367, %v375, %v319
      %v384 = vsel %vm368, %v376, %v326
      %v385 = vsel %vm369, %v377, %v333
      %v386 = vsel %vm370, %v378, %v340
      %v387 = vsel %vm371, %v379, %v347
      %vm388 = vcmp.ge.s32.totalorder %v380, 1
      %vm389 = vcmp.ge.s32.totalorder %v381, 1
      %vm390 = vcmp.ge.s32.totalorder %v382, 1
      %vm391 = vcmp.ge.s32.totalorder %v383, 1
      %vm392 = vcmp.ge.s32.totalorder %v384, 1
      %vm393 = vcmp.ge.s32.totalorder %v385, 1
      %vm394 = vcmp.ge.s32.totalorder %v386, 1
      %vm395 = vcmp.ge.s32.totalorder %v387, 1
      %vm396 = vcmp.le.s32.totalorder %v380, 6
      %vm397 = vcmp.le.s32.totalorder %v381, 6
      %vm398 = vcmp.le.s32.totalorder %v382, 6
      %vm399 = vcmp.le.s32.totalorder %v383, 6
      %vm400 = vcmp.le.s32.totalorder %v384, 6
      %vm401 = vcmp.le.s32.totalorder %v385, 6
      %vm402 = vcmp.le.s32.totalorder %v386, 6
      %vm403 = vcmp.le.s32.totalorder %v387, 6
      %v404 = vld [vmem:[%s274 + $0x127] sm:$0xff]
      %v405 = vld [vmem:[%s274 + $0x12f] sm:$0xff]
      %v406 = vld [vmem:[%s274 + $0x137] sm:$0xff]
      %v407 = vld [vmem:[%s274 + $0x13f] sm:$0xff]
      %v408 = vld [vmem:[%s274 + $0x147] sm:$0xff]
      %v409 = vld [vmem:[%s274 + $0x14f] sm:$0xff]
      %v410 = vld [vmem:[%s274 + $0x157] sm:$0xff]
      %v411 = vld [vmem:[%s274 + $0x15f] sm:$0xff]
      %v412 = vsel %vm388, %v404, 0.0
      %v413 = vsel %vm389, %v405, 0.0
      %v414 = vsel %vm390, %v406, 0.0
      %v415 = vsel %vm391, %v407, 0.0
      %v416 = vsel %vm392, %v408, 0.0
      %v417 = vsel %vm393, %v409, 0.0
      %v418 = vsel %vm394, %v410, 0.0
      %v419 = vsel %vm395, %v411, 0.0
      %v420 = vpack.c.bf16 %v413, %v412
      %v421 = vpack.c.bf16 %v415, %v414
      %v422 = vpack.c.bf16 %v417, %v416
      %v423 = vpack.c.bf16 %v419, %v418
      %v424 = vld [vmem:[%s274 + $0xc8] sm:$0xff]
      %v425 = vld [vmem:[%s274 + $0xd0] sm:$0xff]
      %v426 = vld [vmem:[%s274 + $0xd8] sm:$0xff]
      %v427 = vld [vmem:[%s274 + $0xe0] sm:$0xff]
      %v428 = vld [vmem:[%s274 + $0xe8] sm:$0xff]
      %v429 = vld [vmem:[%s274 + $0xf0] sm:$0xff]
      %v430 = vld [vmem:[%s274 + $0xf8] sm:$0xff]
      %v431 = vld [vmem:[%s274 + $0x100] sm:$0xff]
      %v432 = vpack.c.bf16 %v425, %v424
      %v433 = vpack.c.bf16 %v427, %v426
      %v434 = vpack.c.bf16 %v429, %v428
      %v435 = vpack.c.bf16 %v431, %v430
      %v436 = vld [vmem:[%s274 + $0x128] sm:$0xff]
      %v437 = vld [vmem:[%s274 + $0x130] sm:$0xff]
      %v438 = vld [vmem:[%s274 + $0x138] sm:$0xff]
      %v439 = vld [vmem:[%s274 + $0x140] sm:$0xff]
      %v440 = vld [vmem:[%s274 + $0x148] sm:$0xff]
      %v441 = vld [vmem:[%s274 + $0x150] sm:$0xff]
      %v442 = vld [vmem:[%s274 + $0x158] sm:$0xff]
      %v443 = vld [vmem:[%s274 + $0x160] sm:$0xff]
      %v444 = vpack.c.bf16 %v437, %v436
      %v445 = vpack.c.bf16 %v439, %v438
      %v446 = vpack.c.bf16 %v441, %v440
      %v447 = vpack.c.bf16 %v443, %v442
      %v448 = vld [vmem:[%s274 + $0x6f] sm:$0xff]
      %v449 = vld [vmem:[%s274 + $0x77] sm:$0xff]
      %v450 = vld [vmem:[%s274 + $0x7f] sm:$0xff]
      %v451 = vld [vmem:[%s274 + $0x87] sm:$0xff]
      %v452 = vld [vmem:[%s274 + $0x8f] sm:$0xff]
      %v453 = vld [vmem:[%s274 + $0x97] sm:$0xff]
      %v454 = vld [vmem:[%s274 + $0x9f] sm:$0xff]
      %v455 = vld [vmem:[%s274 + $0xa7] sm:$0xff]
      %v456 = vsel %vm388, %v448, 0.0
      %v457 = vsel %vm389, %v449, 0.0
      %v458 = vsel %vm390, %v450, 0.0
      %v459 = vsel %vm391, %v451, 0.0
      %v460 = vsel %vm392, %v452, 0.0
      %v461 = vsel %vm393, %v453, 0.0
      %v462 = vsel %vm394, %v454, 0.0
      %v463 = vsel %vm395, %v455, 0.0
      %v464 = vpack.c.bf16 %v457, %v456
      %v465 = vpack.c.bf16 %v459, %v458
      %v466 = vpack.c.bf16 %v461, %v460
      %v467 = vpack.c.bf16 %v463, %v462
      %v468 = vld [vmem:[%s274 + $0x10] sm:$0xff]
      %v469 = vld [vmem:[%s274 + $0x18] sm:$0xff]
      %v470 = vld [vmem:[%s274 + $0x20] sm:$0xff]
      %v471 = vld [vmem:[%s274 + $0x28] sm:$0xff]
      %v472 = vld [vmem:[%s274 + $0x30] sm:$0xff]
      %v473 = vld [vmem:[%s274 + $0x38] sm:$0xff]
      %v474 = vld [vmem:[%s274 + $0x40] sm:$0xff]
      %v475 = vld [vmem:[%s274 + $0x48] sm:$0xff]
      %v476 = vpack.c.bf16 %v469, %v468
      %v477 = vpack.c.bf16 %v471, %v470
      %v478 = vpack.c.bf16 %v473, %v472
      %v479 = vpack.c.bf16 %v475, %v474
      %v480 = vld [vmem:[%s274 + $0x70] sm:$0xff]
      %v481 = vld [vmem:[%s274 + $0x78] sm:$0xff]
      %v482 = vld [vmem:[%s274 + $0x80] sm:$0xff]
      %v483 = vld [vmem:[%s274 + $0x88] sm:$0xff]
      %v484 = vld [vmem:[%s274 + $0x90] sm:$0xff]
      %v485 = vld [vmem:[%s274 + $0x98] sm:$0xff]
      %v486 = vld [vmem:[%s274 + $0xa0] sm:$0xff]
      %v487 = vld [vmem:[%s274 + $0xa8] sm:$0xff]
      %v488 = vpack.c.bf16 %v481, %v480
      %v489 = vpack.c.bf16 %v483, %v482
      %v490 = vpack.c.bf16 %v485, %v484
      %v491 = vpack.c.bf16 %v487, %v486
      %v492 = vld [vmem:[%s274 + $0x167] sm:$0xff]
      %v493 = vsel %vm388, %v405, 0.0
      %v494 = vsel %vm389, %v406, 0.0
      %v495 = vsel %vm390, %v407, 0.0
      %v496 = vsel %vm391, %v408, 0.0
      %v497 = vsel %vm392, %v409, 0.0
      %v498 = vsel %vm393, %v410, 0.0
      %v499 = vsel %vm394, %v411, 0.0
      %v500 = vsel %vm395, %v492, 0.0
      %v501 = vpack.c.bf16 %v494, %v493
      %v502 = vpack.c.bf16 %v496, %v495
      %v503 = vpack.c.bf16 %v498, %v497
      %v504 = vpack.c.bf16 %v500, %v499
      %v505 = vld [vmem:[%s274 + $0x108] sm:$0xff]
      %v506 = vpack.c.bf16 %v426, %v425
      %v507 = vpack.c.bf16 %v428, %v427
      %v508 = vpack.c.bf16 %v430, %v429
      %v509 = vpack.c.bf16 %v505, %v431
      %v510 = vld [vmem:[%s274 + $0x168] sm:$0xff]
      %v511 = vpack.c.bf16 %v438, %v437
      %v512 = vpack.c.bf16 %v440, %v439
      %v513 = vpack.c.bf16 %v442, %v441
      %v514 = vpack.c.bf16 %v510, %v443
      %v515 = vld [vmem:[%s1] sm:$0x3]
      %s516 = scalar_lea.vmem %s1, 2
      %v517 = vld [vmem:[%s516] sm:$0x3]
      %vm518 = vcmask 31744
      %v520 = vsel %vm518, %v432, 0
      %v523 = vsel %vm518, %v433, 0
      %v526 = vsel %vm518, %v434, 0
      %v529 = vsel %vm518, %v435, 0
      %vm531 = vcmask 1041408
      %v533 = vsel %vm531, %v517, 0
      %535 = vmatpush.bf16.msra.mxu0 0
      %536 = vmatpush.bf16.msra.mxu0 0
      %537 = vmatpush.bf16.msra.mxu0 0
      %538 = vmatpush.bf16.msra.mxu0 0
      %539 = vmatpush.bf16.msra.mxu0 0
      %540 = vmatpush.bf16.msra.mxu0 0
      %541 = vmatpush.bf16.msra.mxu0 0
      %542 = vmatpush.bf16.msra.mxu0 %v533
      %543 = vmatmul.bf16.gmra.mxu0 %v520
      %v544 = vpop.f32.mrf.mxu0
      %v545 = vadd.f32 0.0, %v544
      %v546 = vpop.f32.mrf.mxu0
      %v547 = vadd.f32 0.0, %v546
      %548 = vmatmul.bf16.gmra.mxu0 %v523
      %v549 = vpop.f32.mrf.mxu0
      %v550 = vadd.f32 0.0, %v549
      %v551 = vpop.f32.mrf.mxu0
      %v552 = vadd.f32 0.0, %v551
      %553 = vmatmul.bf16.gmra.mxu0 %v526
      %v554 = vpop.f32.mrf.mxu0
      %v555 = vadd.f32 0.0, %v554
      %v556 = vpop.f32.mrf.mxu0
      %v557 = vadd.f32 0.0, %v556
      %558 = vmatmul.bf16.gmra.mxu0 %v529
      %v559 = vpop.f32.mrf.mxu0
      %v560 = vadd.f32 0.0, %v559
      %v561 = vpop.f32.mrf.mxu0
      %v562 = vadd.f32 0.0, %v561
      %563 = vdwg.mxu0
      %v565 = vsel %vm518, %v420, 0
      %v568 = vsel %vm518, %v421, 0
      %v571 = vsel %vm518, %v422, 0
      %v574 = vsel %vm518, %v423, 0
      %v577 = vsel %vm531, %v515, 0
      %579 = vmatpush.bf16.msra.mxu0 0
      %580 = vmatpush.bf16.msra.mxu0 0
      %581 = vmatpush.bf16.msra.mxu0 0
      %582 = vmatpush.bf16.msra.mxu0 0
      %583 = vmatpush.bf16.msra.mxu0 0
      %584 = vmatpush.bf16.msra.mxu0 0
      %585 = vmatpush.bf16.msra.mxu0 0
      %586 = vmatpush.bf16.msra.mxu0 %v577
      %587 = vmatmul.bf16.gmra.mxu0 %v565
      %v588 = vpop.f32.mrf.mxu0
      %v589 = vadd.f32 %v545, %v588
      %v590 = vpop.f32.mrf.mxu0
      %v591 = vadd.f32 %v547, %v590
      %592 = vmatmul.bf16.gmra.mxu0 %v568
      %v593 = vpop.f32.mrf.mxu0
      %v594 = vadd.f32 %v550, %v593
      %v595 = vpop.f32.mrf.mxu0
      %v596 = vadd.f32 %v552, %v595
      %597 = vmatmul.bf16.gmra.mxu0 %v571
      %v598 = vpop.f32.mrf.mxu0
      %v599 = vadd.f32 %v555, %v598
      %v600 = vpop.f32.mrf.mxu0
      %v601 = vadd.f32 %v557, %v600
      %602 = vmatmul.bf16.gmra.mxu0 %v574
      %v603 = vpop.f32.mrf.mxu0
      %v604 = vadd.f32 %v560, %v603
      %v605 = vpop.f32.mrf.mxu0
      %v606 = vadd.f32 %v562, %v605
      %607 = vdwg.mxu0
      %s608 = scalar_lea.vmem %s1, 4
      %v609 = vld [vmem:[%s608] sm:$0x3]
      %v611 = vsel %vm518, %v444, 0
      %v614 = vsel %vm518, %v445, 0
      %v617 = vsel %vm518, %v446, 0
      %v620 = vsel %vm518, %v447, 0
      %v623 = vsel %vm531, %v609, 0
      %625 = vmatpush.bf16.msra.mxu0 0
      %626 = vmatpush.bf16.msra.mxu0 0
      %627 = vmatpush.bf16.msra.mxu0 0
      %628 = vmatpush.bf16.msra.mxu0 0
      %629 = vmatpush.bf16.msra.mxu0 0
      %630 = vmatpush.bf16.msra.mxu0 0
      %631 = vmatpush.bf16.msra.mxu0 0
      %632 = vmatpush.bf16.msra.mxu0 %v623
      %633 = vmatmul.bf16.gmra.mxu0 %v611
      %v634 = vpop.f32.mrf.mxu0
      %v635 = vadd.f32 0.0, %v634
      %v636 = vpop.f32.mrf.mxu0
      %v637 = vadd.f32 0.0, %v636
      %638 = vmatmul.bf16.gmra.mxu0 %v614
      %v639 = vpop.f32.mrf.mxu0
      %v640 = vadd.f32 0.0, %v639
      %v641 = vpop.f32.mrf.mxu0
      %v642 = vadd.f32 0.0, %v641
      %643 = vmatmul.bf16.gmra.mxu0 %v617
      %v644 = vpop.f32.mrf.mxu0
      %v645 = vadd.f32 0.0, %v644
      %v646 = vpop.f32.mrf.mxu0
      %v647 = vadd.f32 0.0, %v646
      %648 = vmatmul.bf16.gmra.mxu0 %v620
      %v649 = vpop.f32.mrf.mxu0
      %v650 = vadd.f32 0.0, %v649
      %v651 = vpop.f32.mrf.mxu0
      %v652 = vadd.f32 0.0, %v651
      %653 = vdwg.mxu0
      %v654 = vadd.f32 %v589, %v635
      %v655 = vadd.f32 %v591, %v637
      %v656 = vadd.f32 %v594, %v640
      %v657 = vadd.f32 %v596, %v642
      %v658 = vadd.f32 %v599, %v645
      %v659 = vadd.f32 %v601, %v647
      %v660 = vadd.f32 %v604, %v650
      %v661 = vadd.f32 %v606, %v652
      %s662 = scalar_lea.vmem %s1, 6
      %v663 = vld [vmem:[%s662] sm:$0x3]
      %v665 = vsel %vm518, %v464, 0
      %v668 = vsel %vm518, %v465, 0
      %v671 = vsel %vm518, %v466, 0
      %v674 = vsel %vm518, %v467, 0
      %v677 = vsel %vm531, %v663, 0
      %679 = vmatpush.bf16.msra.mxu0 0
      %680 = vmatpush.bf16.msra.mxu0 0
      %681 = vmatpush.bf16.msra.mxu0 0
      %682 = vmatpush.bf16.msra.mxu0 0
      %683 = vmatpush.bf16.msra.mxu0 0
      %684 = vmatpush.bf16.msra.mxu0 0
      %685 = vmatpush.bf16.msra.mxu0 0
      %686 = vmatpush.bf16.msra.mxu0 %v677
      %687 = vmatmul.bf16.gmra.mxu0 %v665
      %v688 = vpop.f32.mrf.mxu0
      %v689 = vadd.f32 0.0, %v688
      %v690 = vpop.f32.mrf.mxu0
      %v691 = vadd.f32 0.0, %v690
      %692 = vmatmul.bf16.gmra.mxu0 %v668
      %v693 = vpop.f32.mrf.mxu0
      %v694 = vadd.f32 0.0, %v693
      %v695 = vpop.f32.mrf.mxu0
      %v696 = vadd.f32 0.0, %v695
      %697 = vmatmul.bf16.gmra.mxu0 %v671
      %v698 = vpop.f32.mrf.mxu0
      %v699 = vadd.f32 0.0, %v698
      %v700 = vpop.f32.mrf.mxu0
      %v701 = vadd.f32 0.0, %v700
      %702 = vmatmul.bf16.gmra.mxu0 %v674
      %v703 = vpop.f32.mrf.mxu0
      %v704 = vadd.f32 0.0, %v703
      %v705 = vpop.f32.mrf.mxu0
      %v706 = vadd.f32 0.0, %v705
      %707 = vdwg.mxu0
      %v708 = vadd.f32 %v654, %v689
      %v709 = vadd.f32 %v655, %v691
      %v710 = vadd.f32 %v656, %v694
      %v711 = vadd.f32 %v657, %v696
      %v712 = vadd.f32 %v658, %v699
      %v713 = vadd.f32 %v659, %v701
      %v714 = vadd.f32 %v660, %v704
      %v715 = vadd.f32 %v661, %v706
      %s716 = scalar_lea.vmem %s1, 8
      %v717 = vld [vmem:[%s716] sm:$0x3]
      %v719 = vsel %vm518, %v476, 0
      %v722 = vsel %vm518, %v477, 0
      %v725 = vsel %vm518, %v478, 0
      %v728 = vsel %vm518, %v479, 0
      %v731 = vsel %vm531, %v717, 0
      %733 = vmatpush.bf16.msra.mxu0 0
      %734 = vmatpush.bf16.msra.mxu0 0
      %735 = vmatpush.bf16.msra.mxu0 0
      %736 = vmatpush.bf16.msra.mxu0 0
      %737 = vmatpush.bf16.msra.mxu0 0
      %738 = vmatpush.bf16.msra.mxu0 0
      %739 = vmatpush.bf16.msra.mxu0 0
      %740 = vmatpush.bf16.msra.mxu0 %v731
      %741 = vmatmul.bf16.gmra.mxu0 %v719
      %v742 = vpop.f32.mrf.mxu0
      %v743 = vadd.f32 0.0, %v742
      %v744 = vpop.f32.mrf.mxu0
      %v745 = vadd.f32 0.0, %v744
      %746 = vmatmul.bf16.gmra.mxu0 %v722
      %v747 = vpop.f32.mrf.mxu0
      %v748 = vadd.f32 0.0, %v747
      %v749 = vpop.f32.mrf.mxu0
      %v750 = vadd.f32 0.0, %v749
      %751 = vmatmul.bf16.gmra.mxu0 %v725
      %v752 = vpop.f32.mrf.mxu0
      %v753 = vadd.f32 0.0, %v752
      %v754 = vpop.f32.mrf.mxu0
      %v755 = vadd.f32 0.0, %v754
      %756 = vmatmul.bf16.gmra.mxu0 %v728
      %v757 = vpop.f32.mrf.mxu0
      %v758 = vadd.f32 0.0, %v757
      %v759 = vpop.f32.mrf.mxu0
      %v760 = vadd.f32 0.0, %v759
      %761 = vdwg.mxu0
      %v762 = vadd.f32 %v708, %v743
      %v763 = vadd.f32 %v709, %v745
      %v764 = vadd.f32 %v710, %v748
      %v765 = vadd.f32 %v711, %v750
      %v766 = vadd.f32 %v712, %v753
      %v767 = vadd.f32 %v713, %v755
      %v768 = vadd.f32 %v714, %v758
      %v769 = vadd.f32 %v715, %v760
      %s770 = scalar_lea.vmem %s1, 10
      %v771 = vld [vmem:[%s770] sm:$0x3]
      %v773 = vsel %vm518, %v488, 0
      %v776 = vsel %vm518, %v489, 0
      %v779 = vsel %vm518, %v490, 0
      %v782 = vsel %vm518, %v491, 0
      %v785 = vsel %vm531, %v771, 0
      %787 = vmatpush.bf16.msra.mxu0 0
      %788 = vmatpush.bf16.msra.mxu0 0
      %789 = vmatpush.bf16.msra.mxu0 0
      %790 = vmatpush.bf16.msra.mxu0 0
      %791 = vmatpush.bf16.msra.mxu0 0
      %792 = vmatpush.bf16.msra.mxu0 0
      %793 = vmatpush.bf16.msra.mxu0 0
      %794 = vmatpush.bf16.msra.mxu0 %v785
      %795 = vmatmul.bf16.gmra.mxu0 %v773
      %v796 = vpop.f32.mrf.mxu0
      %v797 = vadd.f32 0.0, %v796
      %v798 = vpop.f32.mrf.mxu0
      %v799 = vadd.f32 0.0, %v798
      %800 = vmatmul.bf16.gmra.mxu0 %v776
      %v801 = vpop.f32.mrf.mxu0
      %v802 = vadd.f32 0.0, %v801
      %v803 = vpop.f32.mrf.mxu0
      %v804 = vadd.f32 0.0, %v803
      %805 = vmatmul.bf16.gmra.mxu0 %v779
      %v806 = vpop.f32.mrf.mxu0
      %v807 = vadd.f32 0.0, %v806
      %v808 = vpop.f32.mrf.mxu0
      %v809 = vadd.f32 0.0, %v808
      %810 = vmatmul.bf16.gmra.mxu0 %v782
      %v811 = vpop.f32.mrf.mxu0
      %v812 = vadd.f32 0.0, %v811
      %v813 = vpop.f32.mrf.mxu0
      %v814 = vadd.f32 0.0, %v813
      %815 = vdwg.mxu0
      %v816 = vadd.f32 %v762, %v797
      %v817 = vadd.f32 %v763, %v799
      %v818 = vadd.f32 %v764, %v802
      %v819 = vadd.f32 %v765, %v804
      %v820 = vadd.f32 %v766, %v807
      %v821 = vadd.f32 %v767, %v809
      %v822 = vadd.f32 %v768, %v812
      %v823 = vadd.f32 %v769, %v814
      %s824 = scalar_lea.vmem %s1, 12
      %v825 = vld [vmem:[%s824] sm:$0x3]
      %v827 = vsel %vm518, %v501, 0
      %v830 = vsel %vm518, %v502, 0
      %v833 = vsel %vm518, %v503, 0
      %v836 = vsel %vm518, %v504, 0
      %v839 = vsel %vm531, %v825, 0
      %841 = vmatpush.bf16.msra.mxu0 0
      %842 = vmatpush.bf16.msra.mxu0 0
      %843 = vmatpush.bf16.msra.mxu0 0
      %844 = vmatpush.bf16.msra.mxu0 0
      %845 = vmatpush.bf16.msra.mxu0 0
      %846 = vmatpush.bf16.msra.mxu0 0
      %847 = vmatpush.bf16.msra.mxu0 0
      %848 = vmatpush.bf16.msra.mxu0 %v839
      %849 = vmatmul.bf16.gmra.mxu0 %v827
      %v850 = vpop.f32.mrf.mxu0
      %v851 = vadd.f32 0.0, %v850
      %v852 = vpop.f32.mrf.mxu0
      %v853 = vadd.f32 0.0, %v852
      %854 = vmatmul.bf16.gmra.mxu0 %v830
      %v855 = vpop.f32.mrf.mxu0
      %v856 = vadd.f32 0.0, %v855
      %v857 = vpop.f32.mrf.mxu0
      %v858 = vadd.f32 0.0, %v857
      %859 = vmatmul.bf16.gmra.mxu0 %v833
      %v860 = vpop.f32.mrf.mxu0
      %v861 = vadd.f32 0.0, %v860
      %v862 = vpop.f32.mrf.mxu0
      %v863 = vadd.f32 0.0, %v862
      %864 = vmatmul.bf16.gmra.mxu0 %v836
      %v865 = vpop.f32.mrf.mxu0
      %v866 = vadd.f32 0.0, %v865
      %v867 = vpop.f32.mrf.mxu0
      %v868 = vadd.f32 0.0, %v867
      %869 = vdwg.mxu0
      %v870 = vadd.f32 %v816, %v851
      %v871 = vadd.f32 %v817, %v853
      %v872 = vadd.f32 %v818, %v856
      %v873 = vadd.f32 %v819, %v858
      %v874 = vadd.f32 %v820, %v861
      %v875 = vadd.f32 %v821, %v863
      %v876 = vadd.f32 %v822, %v866
      %v877 = vadd.f32 %v823, %v868
      %s878 = scalar_lea.vmem %s1, 14
      %v879 = vld [vmem:[%s878] sm:$0x3]
      %v881 = vsel %vm518, %v506, 0
      %v884 = vsel %vm518, %v507, 0
      %v887 = vsel %vm518, %v508, 0
      %v890 = vsel %vm518, %v509, 0
      %v893 = vsel %vm531, %v879, 0
      %895 = vmatpush.bf16.msra.mxu0 0
      %896 = vmatpush.bf16.msra.mxu0 0
      %897 = vmatpush.bf16.msra.mxu0 0
      %898 = vmatpush.bf16.msra.mxu0 0
      %899 = vmatpush.bf16.msra.mxu0 0
      %900 = vmatpush.bf16.msra.mxu0 0
      %901 = vmatpush.bf16.msra.mxu0 0
      %902 = vmatpush.bf16.msra.mxu0 %v893
      %903 = vmatmul.bf16.gmra.mxu0 %v881
      %v904 = vpop.f32.mrf.mxu0
      %v905 = vadd.f32 0.0, %v904
      %v906 = vpop.f32.mrf.mxu0
      %v907 = vadd.f32 0.0, %v906
      %908 = vmatmul.bf16.gmra.mxu0 %v884
      %v909 = vpop.f32.mrf.mxu0
      %v910 = vadd.f32 0.0, %v909
      %v911 = vpop.f32.mrf.mxu0
      %v912 = vadd.f32 0.0, %v911
      %913 = vmatmul.bf16.gmra.mxu0 %v887
      %v914 = vpop.f32.mrf.mxu0
      %v915 = vadd.f32 0.0, %v914
      %v916 = vpop.f32.mrf.mxu0
      %v917 = vadd.f32 0.0, %v916
      %918 = vmatmul.bf16.gmra.mxu0 %v890
      %v919 = vpop.f32.mrf.mxu0
      %v920 = vadd.f32 0.0, %v919
      %v921 = vpop.f32.mrf.mxu0
      %v922 = vadd.f32 0.0, %v921
      %923 = vdwg.mxu0
      %v924 = vadd.f32 %v870, %v905
      %v925 = vadd.f32 %v871, %v907
      %v926 = vadd.f32 %v872, %v910
      %v927 = vadd.f32 %v873, %v912
      %v928 = vadd.f32 %v874, %v915
      %v929 = vadd.f32 %v875, %v917
      %v930 = vadd.f32 %v876, %v920
      %v931 = vadd.f32 %v877, %v922
      %s932 = scalar_lea.vmem %s1, 16
      %v933 = vld [vmem:[%s932] sm:$0x3]
      %v935 = vsel %vm518, %v511, 0
      %v938 = vsel %vm518, %v512, 0
      %v941 = vsel %vm518, %v513, 0
      %v944 = vsel %vm518, %v514, 0
      %v947 = vsel %vm531, %v933, 0
      %949 = vmatpush.bf16.msra.mxu0 0
      %950 = vmatpush.bf16.msra.mxu0 0
      %951 = vmatpush.bf16.msra.mxu0 0
      %952 = vmatpush.bf16.msra.mxu0 0
      %953 = vmatpush.bf16.msra.mxu0 0
      %954 = vmatpush.bf16.msra.mxu0 0
      %955 = vmatpush.bf16.msra.mxu0 0
      %956 = vmatpush.bf16.msra.mxu0 %v947
      %957 = vmatmul.bf16.gmra.mxu0 %v935
      %v958 = vpop.f32.mrf.mxu0
      %v959 = vadd.f32 0.0, %v958
      %v960 = vpop.f32.mrf.mxu0
      %v961 = vadd.f32 0.0, %v960
      %962 = vmatmul.bf16.gmra.mxu0 %v938
      %v963 = vpop.f32.mrf.mxu0
      %v964 = vadd.f32 0.0, %v963
      %v965 = vpop.f32.mrf.mxu0
      %v966 = vadd.f32 0.0, %v965
      %967 = vmatmul.bf16.gmra.mxu0 %v941
      %v968 = vpop.f32.mrf.mxu0
      %v969 = vadd.f32 0.0, %v968
      %v970 = vpop.f32.mrf.mxu0
      %v971 = vadd.f32 0.0, %v970
      %972 = vmatmul.bf16.gmra.mxu0 %v944
      %v973 = vpop.f32.mrf.mxu0
      %v974 = vadd.f32 0.0, %v973
      %v975 = vpop.f32.mrf.mxu0
      %v976 = vadd.f32 0.0, %v975
      %977 = vdwg.mxu0
      %v978 = vadd.f32 %v924, %v959
      %v979 = vadd.f32 %v925, %v961
      %v980 = vadd.f32 %v926, %v964
      %v981 = vadd.f32 %v927, %v966
      %v982 = vadd.f32 %v928, %v969
      %v983 = vadd.f32 %v929, %v971
      %v984 = vadd.f32 %v930, %v974
      %v985 = vadd.f32 %v931, %v976
      %v986 = vld [vmem:[%s2] sm:$0x1]
      %v988 = vperm.slane %v986, 0
      %v990 = vadd.f32 %v978, %v988
      %v991 = vadd.f32 %v979, %v988
      %v992 = vadd.f32 %v980, %v988
      %v993 = vadd.f32 %v981, %v988
      %v994 = vadd.f32 %v982, %v988
      %v995 = vadd.f32 %v983, %v988
      %v996 = vadd.f32 %v984, %v988
      %v997 = vadd.f32 %v985, %v988
      %v998 = vmax.f32 %v990, 0.0
      %v999 = vmax.f32 %v991, 0.0
      %v1000 = vmax.f32 %v992, 0.0
      %v1001 = vmax.f32 %v993, 0.0
      %v1002 = vmax.f32 %v994, 0.0
      %v1003 = vmax.f32 %v995, 0.0
      %v1004 = vmax.f32 %v996, 0.0
      %v1005 = vmax.f32 %v997, 0.0
      %v1006 = vld [vmem:[%s3] sm:$0x3]
      %v1007 = vld [vmem:[%s4] sm:$0x1]
      %v1009 = vperm.slane %v1007, 0
      %v1012 = vsel %vm531, %v1006, 0
      %1014 = vmatpush.bf16.msra.mxu0 0
      %1015 = vmatpush.bf16.msra.mxu0 0
      %1016 = vmatpush.bf16.msra.mxu0 0
      %1017 = vmatpush.bf16.msra.mxu0 0
      %1018 = vmatpush.bf16.msra.mxu0 0
      %1019 = vmatpush.bf16.msra.mxu0 0
      %1020 = vmatpush.bf16.msra.mxu0 0
      %1021 = vmatpush.bf16.msra.mxu0 %v1012
      %1022 = vmatmul.bf16.gmra.mxu0 %v719
      %v1023 = vpop.f32.mrf.mxu0
      %v1024 = vadd.f32 %v1009, %v1023
      %v1025 = vpop.f32.mrf.mxu0
      %v1026 = vadd.f32 %v1009, %v1025
      %1027 = vmatmul.bf16.gmra.mxu0 %v722
      %v1028 = vpop.f32.mrf.mxu0
      %v1029 = vadd.f32 %v1009, %v1028
      %v1030 = vpop.f32.mrf.mxu0
      %v1031 = vadd.f32 %v1009, %v1030
      %1032 = vmatmul.bf16.gmra.mxu0 %v725
      %v1033 = vpop.f32.mrf.mxu0
      %v1034 = vadd.f32 %v1009, %v1033
      %v1035 = vpop.f32.mrf.mxu0
      %v1036 = vadd.f32 %v1009, %v1035
      %1037 = vmatmul.bf16.gmra.mxu0 %v728
      %v1038 = vpop.f32.mrf.mxu0
      %v1039 = vadd.f32 %v1009, %v1038
      %v1040 = vpop.f32.mrf.mxu0
      %v1041 = vadd.f32 %v1009, %v1040
      %1042 = vdwg.mxu0
      %vm1043 = vcmask 64512
      %1044 = vst.msk [vmem:[#allocation2] sm:$0xff] %vm1043, 0.0
      %1045 = vst.msk [vmem:[#allocation2 + $0x8] sm:$0xff] %vm1043, 0.0
      %1046 = vst.msk [vmem:[#allocation2 + $0x50] sm:$0xff] %vm1043, 0.0
      %1047 = vst.msk [vmem:[#allocation2 + $0x58] sm:$0xff] %vm1043, 0.0
      %1048 = vst.msk [vmem:[#allocation2 + $0x10] sm:$0xff] %vm1043, %v998
      %1049 = vst.msk [vmem:[#allocation2 + $0x18] sm:$0xff] %vm1043, %v999
      %1050 = vst.msk [vmem:[#allocation2 + $0x20] sm:$0xff] %vm1043, %v1000
      %1051 = vst.msk [vmem:[#allocation2 + $0x28] sm:$0xff] %vm1043, %v1001
      %1052 = vst.msk [vmem:[#allocation2 + $0x30] sm:$0xff] %vm1043, %v1002
      %1053 = vst.msk [vmem:[#allocation2 + $0x38] sm:$0xff] %vm1043, %v1003
      %1054 = vst.msk [vmem:[#allocation2 + $0x40] sm:$0xff] %vm1043, %v1004
      %1055 = vst.msk [vmem:[#allocation2 + $0x48] sm:$0xff] %vm1043, %v1005
      %v1056 = vld [vmem:[#allocation2 + $0x7] sm:$0xff]
      %v1057 = vld [vmem:[#allocation2 + $0xf] sm:$0xff]
      %v1058 = vld [vmem:[#allocation2 + $0x17] sm:$0xff]
      %v1059 = vld [vmem:[#allocation2 + $0x1f] sm:$0xff]
      %v1060 = vld [vmem:[#allocation2 + $0x27] sm:$0xff]
      %v1061 = vld [vmem:[#allocation2 + $0x2f] sm:$0xff]
      %v1062 = vld [vmem:[#allocation2 + $0x37] sm:$0xff]
      %v1063 = vld [vmem:[#allocation2 + $0x3f] sm:$0xff]
      %v1064 = vsel %vm388, %v1056, 0.0
      %v1065 = vsel %vm389, %v1057, 0.0
      %v1066 = vsel %vm390, %v1058, 0.0
      %v1067 = vsel %vm391, %v1059, 0.0
      %v1068 = vsel %vm392, %v1060, 0.0
      %v1069 = vsel %vm393, %v1061, 0.0
      %v1070 = vsel %vm394, %v1062, 0.0
      %v1071 = vsel %vm395, %v1063, 0.0
      %v1072 = vpack.c.bf16 %v1065, %v1064
      %v1073 = vpack.c.bf16 %v1067, %v1066
      %v1074 = vpack.c.bf16 %v1069, %v1068
      %v1075 = vpack.c.bf16 %v1071, %v1070
      %v1076 = vld [vmem:[#allocation2 + $0x8] sm:$0xff]
      %v1077 = vld [vmem:[#allocation2 + $0x10] sm:$0xff]
      %v1078 = vld [vmem:[#allocation2 + $0x18] sm:$0xff]
      %v1079 = vld [vmem:[#allocation2 + $0x20] sm:$0xff]
      %v1080 = vld [vmem:[#allocation2 + $0x28] sm:$0xff]
      %v1081 = vld [vmem:[#allocation2 + $0x30] sm:$0xff]
      %v1082 = vld [vmem:[#allocation2 + $0x38] sm:$0xff]
      %v1083 = vld [vmem:[#allocation2 + $0x40] sm:$0xff]
      %v1084 = vpack.c.bf16 %v1077, %v1076
      %v1085 = vpack.c.bf16 %v1079, %v1078
      %v1086 = vpack.c.bf16 %v1081, %v1080
      %v1087 = vpack.c.bf16 %v1083, %v1082
      %v1088 = vld [vmem:[#allocation2 + $0x9] sm:$0xff]
      %v1089 = vld [vmem:[#allocation2 + $0x11] sm:$0xff]
      %v1090 = vld [vmem:[#allocation2 + $0x19] sm:$0xff]
      %v1091 = vld [vmem:[#allocation2 + $0x21] sm:$0xff]
      %v1092 = vld [vmem:[#allocation2 + $0x29] sm:$0xff]
      %v1093 = vld [vmem:[#allocation2 + $0x31] sm:$0xff]
      %v1094 = vld [vmem:[#allocation2 + $0x39] sm:$0xff]
      %v1095 = vld [vmem:[#allocation2 + $0x41] sm:$0xff]
      %v1096 = vsel %vm396, %v1088, 0.0
      %v1097 = vsel %vm397, %v1089, 0.0
      %v1098 = vsel %vm398, %v1090, 0.0
      %v1099 = vsel %vm399, %v1091, 0.0
      %v1100 = vsel %vm400, %v1092, 0.0
      %v1101 = vsel %vm401, %v1093, 0.0
      %v1102 = vsel %vm402, %v1094, 0.0
      %v1103 = vsel %vm403, %v1095, 0.0
      %v1104 = vpack.c.bf16 %v1097, %v1096
      %v1105 = vpack.c.bf16 %v1099, %v1098
      %v1106 = vpack.c.bf16 %v1101, %v1100
      %v1107 = vpack.c.bf16 %v1103, %v1102
      %v1108 = vld [vmem:[#allocation2 + $0x47] sm:$0xff]
      %v1109 = vsel %vm388, %v1057, 0.0
      %v1110 = vsel %vm389, %v1058, 0.0
      %v1111 = vsel %vm390, %v1059, 0.0
      %v1112 = vsel %vm391, %v1060, 0.0
      %v1113 = vsel %vm392, %v1061, 0.0
      %v1114 = vsel %vm393, %v1062, 0.0
      %v1115 = vsel %vm394, %v1063, 0.0
      %v1116 = vsel %vm395, %v1108, 0.0
      %v1117 = vpack.c.bf16 %v1110, %v1109
      %v1118 = vpack.c.bf16 %v1112, %v1111
      %v1119 = vpack.c.bf16 %v1114, %v1113
      %v1120 = vpack.c.bf16 %v1116, %v1115
      %v1121 = vld [vmem:[#allocation2 + $0x48] sm:$0xff]
      %v1122 = vpack.c.bf16 %v1078, %v1077
      %v1123 = vpack.c.bf16 %v1080, %v1079
      %v1124 = vpack.c.bf16 %v1082, %v1081
      %v1125 = vpack.c.bf16 %v1121, %v1083
      %v1126 = vld [vmem:[#allocation2 + $0x49] sm:$0xff]
      %v1127 = vsel %vm396, %v1089, 0.0
      %v1128 = vsel %vm397, %v1090, 0.0
      %v1129 = vsel %vm398, %v1091, 0.0
      %v1130 = vsel %vm399, %v1092, 0.0
      %v1131 = vsel %vm400, %v1093, 0.0
      %v1132 = vsel %vm401, %v1094, 0.0
      %v1133 = vsel %vm402, %v1095, 0.0
      %v1134 = vsel %vm403, %v1126, 0.0
      %v1135 = vpack.c.bf16 %v1128, %v1127
      %v1136 = vpack.c.bf16 %v1130, %v1129
      %v1137 = vpack.c.bf16 %v1132, %v1131
      %v1138 = vpack.c.bf16 %v1134, %v1133
      %v1139 = vld [vmem:[#allocation2 + $0x4f] sm:$0xff]
      %v1140 = vsel %vm388, %v1058, 0.0
      %v1141 = vsel %vm389, %v1059, 0.0
      %v1142 = vsel %vm390, %v1060, 0.0
      %v1143 = vsel %vm391, %v1061, 0.0
      %v1144 = vsel %vm392, %v1062, 0.0
      %v1145 = vsel %vm393, %v1063, 0.0
      %v1146 = vsel %vm394, %v1108, 0.0
      %v1147 = vsel %vm395, %v1139, 0.0
      %v1148 = vpack.c.bf16 %v1141, %v1140
      %v1149 = vpack.c.bf16 %v1143, %v1142
      %v1150 = vpack.c.bf16 %v1145, %v1144
      %v1151 = vpack.c.bf16 %v1147, %v1146
      %v1152 = vld [vmem:[#allocation2 + $0x50] sm:$0xff]
      %v1153 = vpack.c.bf16 %v1152, %v1121
      %v1154 = vld [vmem:[#allocation2 + $0x51] sm:$0xff]
      %v1155 = vsel %vm396, %v1090, 0.0
      %v1156 = vsel %vm397, %v1091, 0.0
      %v1157 = vsel %vm398, %v1092, 0.0
      %v1158 = vsel %vm399, %v1093, 0.0
      %v1159 = vsel %vm400, %v1094, 0.0
      %v1160 = vsel %vm401, %v1095, 0.0
      %v1161 = vsel %vm402, %v1126, 0.0
      %v1162 = vsel %vm403, %v1154, 0.0
      %v1163 = vpack.c.bf16 %v1156, %v1155
      %v1164 = vpack.c.bf16 %v1158, %v1157
      %v1165 = vpack.c.bf16 %v1160, %v1159
      %v1166 = vpack.c.bf16 %v1162, %v1161
      %v1167 = vld [vmem:[%s5] sm:$0xf]
      %s1168 = scalar_lea.vmem %s5, 4
      %v1169 = vld [vmem:[%s1168] sm:$0xf]
      %v1171 = vsel %vm1043, %v1084, 0
      %v1174 = vsel %vm1043, %v1085, 0
      %v1177 = vsel %vm1043, %v1086, 0
      %v1180 = vsel %vm1043, %v1087, 0
      %vm1182 = vcmask 1043456
      %v1184 = vsel %vm1182, %v1169, 0
      %1186 = vmatpush.bf16.msra.mxu0 0
      %1187 = vmatpush.bf16.msra.mxu0 0
      %1188 = vmatpush.bf16.msra.mxu0 0
      %1189 = vmatpush.bf16.msra.mxu0 0
      %1190 = vmatpush.bf16.msra.mxu0 0
      %1191 = vmatpush.bf16.msra.mxu0 0
      %1192 = vmatpush.bf16.msra.mxu0 0
      %1193 = vmatpush.bf16.msra.mxu0 %v1184
      %1194 = vmatmul.bf16.gmra.mxu0 %v1171
      %v1195 = vpop.f32.mrf.mxu0
      %v1196 = vadd.f32 0.0, %v1195
      %v1197 = vpop.f32.mrf.mxu0
      %v1198 = vadd.f32 0.0, %v1197
      %1199 = vmatmul.bf16.gmra.mxu0 %v1174
      %v1200 = vpop.f32.mrf.mxu0
      %v1201 = vadd.f32 0.0, %v1200
      %v1202 = vpop.f32.mrf.mxu0
      %v1203 = vadd.f32 0.0, %v1202
      %1204 = vmatmul.bf16.gmra.mxu0 %v1177
      %v1205 = vpop.f32.mrf.mxu0
      %v1206 = vadd.f32 0.0, %v1205
      %v1207 = vpop.f32.mrf.mxu0
      %v1208 = vadd.f32 0.0, %v1207
      %1209 = vmatmul.bf16.gmra.mxu0 %v1180
      %v1210 = vpop.f32.mrf.mxu0
      %v1211 = vadd.f32 0.0, %v1210
      %v1212 = vpop.f32.mrf.mxu0
      %v1213 = vadd.f32 0.0, %v1212
      %1214 = vdwg.mxu0
      %v1216 = vsel %vm1043, %v1072, 0
      %v1219 = vsel %vm1043, %v1073, 0
      %v1222 = vsel %vm1043, %v1074, 0
      %v1225 = vsel %vm1043, %v1075, 0
      %v1228 = vsel %vm1182, %v1167, 0
      %1230 = vmatpush.bf16.msra.mxu0 0
      %1231 = vmatpush.bf16.msra.mxu0 0
      %1232 = vmatpush.bf16.msra.mxu0 0
      %1233 = vmatpush.bf16.msra.mxu0 0
      %1234 = vmatpush.bf16.msra.mxu0 0
      %1235 = vmatpush.bf16.msra.mxu0 0
      %1236 = vmatpush.bf16.msra.mxu0 0
      %1237 = vmatpush.bf16.msra.mxu0 %v1228
      %1238 = vmatmul.bf16.gmra.mxu0 %v1216
      %v1239 = vpop.f32.mrf.mxu0
      %v1240 = vadd.f32 %v1196, %v1239
      %v1241 = vpop.f32.mrf.mxu0
      %v1242 = vadd.f32 %v1198, %v1241
      %1243 = vmatmul.bf16.gmra.mxu0 %v1219
      %v1244 = vpop.f32.mrf.mxu0
      %v1245 = vadd.f32 %v1201, %v1244
      %v1246 = vpop.f32.mrf.mxu0
      %v1247 = vadd.f32 %v1203, %v1246
      %1248 = vmatmul.bf16.gmra.mxu0 %v1222
      %v1249 = vpop.f32.mrf.mxu0
      %v1250 = vadd.f32 %v1206, %v1249
      %v1251 = vpop.f32.mrf.mxu0
      %v1252 = vadd.f32 %v1208, %v1251
      %1253 = vmatmul.bf16.gmra.mxu0 %v1225
      %v1254 = vpop.f32.mrf.mxu0
      %v1255 = vadd.f32 %v1211, %v1254
      %v1256 = vpop.f32.mrf.mxu0
      %v1257 = vadd.f32 %v1213, %v1256
      %1258 = vdwg.mxu0
      %s1259 = scalar_lea.vmem %s5, 8
      %v1260 = vld [vmem:[%s1259] sm:$0xf]
      %v1262 = vsel %vm1043, %v1104, 0
      %v1265 = vsel %vm1043, %v1105, 0
      %v1268 = vsel %vm1043, %v1106, 0
      %v1271 = vsel %vm1043, %v1107, 0
      %v1274 = vsel %vm1182, %v1260, 0
      %1276 = vmatpush.bf16.msra.mxu0 0
      %1277 = vmatpush.bf16.msra.mxu0 0
      %1278 = vmatpush.bf16.msra.mxu0 0
      %1279 = vmatpush.bf16.msra.mxu0 0
      %1280 = vmatpush.bf16.msra.mxu0 0
      %1281 = vmatpush.bf16.msra.mxu0 0
      %1282 = vmatpush.bf16.msra.mxu0 0
      %1283 = vmatpush.bf16.msra.mxu0 %v1274
      %1284 = vmatmul.bf16.gmra.mxu0 %v1262
      %v1285 = vpop.f32.mrf.mxu0
      %v1286 = vadd.f32 0.0, %v1285
      %v1287 = vpop.f32.mrf.mxu0
      %v1288 = vadd.f32 0.0, %v1287
      %1289 = vmatmul.bf16.gmra.mxu0 %v1265
      %v1290 = vpop.f32.mrf.mxu0
      %v1291 = vadd.f32 0.0, %v1290
      %v1292 = vpop.f32.mrf.mxu0
      %v1293 = vadd.f32 0.0, %v1292
      %1294 = vmatmul.bf16.gmra.mxu0 %v1268
      %v1295 = vpop.f32.mrf.mxu0
      %v1296 = vadd.f32 0.0, %v1295
      %v1297 = vpop.f32.mrf.mxu0
      %v1298 = vadd.f32 0.0, %v1297
      %1299 = vmatmul.bf16.gmra.mxu0 %v1271
      %v1300 = vpop.f32.mrf.mxu0
      %v1301 = vadd.f32 0.0, %v1300
      %v1302 = vpop.f32.mrf.mxu0
      %v1303 = vadd.f32 0.0, %v1302
      %1304 = vdwg.mxu0
      %v1305 = vadd.f32 %v1240, %v1286
      %v1306 = vadd.f32 %v1242, %v1288
      %v1307 = vadd.f32 %v1245, %v1291
      %v1308 = vadd.f32 %v1247, %v1293
      %v1309 = vadd.f32 %v1250, %v1296
      %v1310 = vadd.f32 %v1252, %v1298
      %v1311 = vadd.f32 %v1255, %v1301
      %v1312 = vadd.f32 %v1257, %v1303
      %s1313 = scalar_lea.vmem %s5, 12
      %v1314 = vld [vmem:[%s1313] sm:$0xf]
      %v1316 = vsel %vm1043, %v1117, 0
      %v1319 = vsel %vm1043, %v1118, 0
      %v1322 = vsel %vm1043, %v1119, 0
      %v1325 = vsel %vm1043, %v1120, 0
      %v1328 = vsel %vm1182, %v1314, 0
      %1330 = vmatpush.bf16.msra.mxu0 0
      %1331 = vmatpush.bf16.msra.mxu0 0
      %1332 = vmatpush.bf16.msra.mxu0 0
      %1333 = vmatpush.bf16.msra.mxu0 0
      %1334 = vmatpush.bf16.msra.mxu0 0
      %1335 = vmatpush.bf16.msra.mxu0 0
      %1336 = vmatpush.bf16.msra.mxu0 0
      %1337 = vmatpush.bf16.msra.mxu0 %v1328
      %1338 = vmatmul.bf16.gmra.mxu0 %v1316
      %v1339 = vpop.f32.mrf.mxu0
      %v1340 = vadd.f32 0.0, %v1339
      %v1341 = vpop.f32.mrf.mxu0
      %v1342 = vadd.f32 0.0, %v1341
      %1343 = vmatmul.bf16.gmra.mxu0 %v1319
      %v1344 = vpop.f32.mrf.mxu0
      %v1345 = vadd.f32 0.0, %v1344
      %v1346 = vpop.f32.mrf.mxu0
      %v1347 = vadd.f32 0.0, %v1346
      %1348 = vmatmul.bf16.gmra.mxu0 %v1322
      %v1349 = vpop.f32.mrf.mxu0
      %v1350 = vadd.f32 0.0, %v1349
      %v1351 = vpop.f32.mrf.mxu0
      %v1352 = vadd.f32 0.0, %v1351
      %1353 = vmatmul.bf16.gmra.mxu0 %v1325
      %v1354 = vpop.f32.mrf.mxu0
      %v1355 = vadd.f32 0.0, %v1354
      %v1356 = vpop.f32.mrf.mxu0
      %v1357 = vadd.f32 0.0, %v1356
      %1358 = vdwg.mxu0
      %v1359 = vadd.f32 %v1305, %v1340
      %v1360 = vadd.f32 %v1306, %v1342
      %v1361 = vadd.f32 %v1307, %v1345
      %v1362 = vadd.f32 %v1308, %v1347
      %v1363 = vadd.f32 %v1309, %v1350
      %v1364 = vadd.f32 %v1310, %v1352
      %v1365 = vadd.f32 %v1311, %v1355
      %v1366 = vadd.f32 %v1312, %v1357
      %s1367 = scalar_lea.vmem %s5, 16
      %v1368 = vld [vmem:[%s1367] sm:$0xf]
      %v1370 = vsel %vm1043, %v1122, 0
      %v1373 = vsel %vm1043, %v1123, 0
      %v1376 = vsel %vm1043, %v1124, 0
      %v1379 = vsel %vm1043, %v1125, 0
      %v1382 = vsel %vm1182, %v1368, 0
      %1384 = vmatpush.bf16.msra.mxu0 0
      %1385 = vmatpush.bf16.msra.mxu0 0
      %1386 = vmatpush.bf16.msra.mxu0 0
      %1387 = vmatpush.bf16.msra.mxu0 0
      %1388 = vmatpush.bf16.msra.mxu0 0
      %1389 = vmatpush.bf16.msra.mxu0 0
      %1390 = vmatpush.bf16.msra.mxu0 0
      %1391 = vmatpush.bf16.msra.mxu0 %v1382
      %1392 = vmatmul.bf16.gmra.mxu0 %v1370
      %v1393 = vpop.f32.mrf.mxu0
      %v1394 = vadd.f32 0.0, %v1393
      %v1395 = vpop.f32.mrf.mxu0
      %v1396 = vadd.f32 0.0, %v1395
      %1397 = vmatmul.bf16.gmra.mxu0 %v1373
      %v1398 = vpop.f32.mrf.mxu0
      %v1399 = vadd.f32 0.0, %v1398
      %v1400 = vpop.f32.mrf.mxu0
      %v1401 = vadd.f32 0.0, %v1400
      %1402 = vmatmul.bf16.gmra.mxu0 %v1376
      %v1403 = vpop.f32.mrf.mxu0
      %v1404 = vadd.f32 0.0, %v1403
      %v1405 = vpop.f32.mrf.mxu0
      %v1406 = vadd.f32 0.0, %v1405
      %1407 = vmatmul.bf16.gmra.mxu0 %v1379
      %v1408 = vpop.f32.mrf.mxu0
      %v1409 = vadd.f32 0.0, %v1408
      %v1410 = vpop.f32.mrf.mxu0
      %v1411 = vadd.f32 0.0, %v1410
      %1412 = vdwg.mxu0
      %v1413 = vadd.f32 %v1359, %v1394
      %v1414 = vadd.f32 %v1360, %v1396
      %v1415 = vadd.f32 %v1361, %v1399
      %v1416 = vadd.f32 %v1362, %v1401
      %v1417 = vadd.f32 %v1363, %v1404
      %v1418 = vadd.f32 %v1364, %v1406
      %v1419 = vadd.f32 %v1365, %v1409
      %v1420 = vadd.f32 %v1366, %v1411
      %s1421 = scalar_lea.vmem %s5, 20
      %v1422 = vld [vmem:[%s1421] sm:$0xf]
      %v1424 = vsel %vm1043, %v1135, 0
      %v1427 = vsel %vm1043, %v1136, 0
      %v1430 = vsel %vm1043, %v1137, 0
      %v1433 = vsel %vm1043, %v1138, 0
      %v1436 = vsel %vm1182, %v1422, 0
      %1438 = vmatpush.bf16.msra.mxu0 0
      %1439 = vmatpush.bf16.msra.mxu0 0
      %1440 = vmatpush.bf16.msra.mxu0 0
      %1441 = vmatpush.bf16.msra.mxu0 0
      %1442 = vmatpush.bf16.msra.mxu0 0
      %1443 = vmatpush.bf16.msra.mxu0 0
      %1444 = vmatpush.bf16.msra.mxu0 0
      %1445 = vmatpush.bf16.msra.mxu0 %v1436
      %1446 = vmatmul.bf16.gmra.mxu0 %v1424
      %v1447 = vpop.f32.mrf.mxu0
      %v1448 = vadd.f32 0.0, %v1447
      %v1449 = vpop.f32.mrf.mxu0
      %v1450 = vadd.f32 0.0, %v1449
      %1451 = vmatmul.bf16.gmra.mxu0 %v1427
      %v1452 = vpop.f32.mrf.mxu0
      %v1453 = vadd.f32 0.0, %v1452
      %v1454 = vpop.f32.mrf.mxu0
      %v1455 = vadd.f32 0.0, %v1454
      %1456 = vmatmul.bf16.gmra.mxu0 %v1430
      %v1457 = vpop.f32.mrf.mxu0
      %v1458 = vadd.f32 0.0, %v1457
      %v1459 = vpop.f32.mrf.mxu0
      %v1460 = vadd.f32 0.0, %v1459
      %1461 = vmatmul.bf16.gmra.mxu0 %v1433
      %v1462 = vpop.f32.mrf.mxu0
      %v1463 = vadd.f32 0.0, %v1462
      %v1464 = vpop.f32.mrf.mxu0
      %v1465 = vadd.f32 0.0, %v1464
      %1466 = vdwg.mxu0
      %v1467 = vadd.f32 %v1413, %v1448
      %v1468 = vadd.f32 %v1414, %v1450
      %v1469 = vadd.f32 %v1415, %v1453
      %v1470 = vadd.f32 %v1416, %v1455
      %v1471 = vadd.f32 %v1417, %v1458
      %v1472 = vadd.f32 %v1418, %v1460
      %v1473 = vadd.f32 %v1419, %v1463
      %v1474 = vadd.f32 %v1420, %v1465
      %s1475 = scalar_lea.vmem %s5, 24
      %v1476 = vld [vmem:[%s1475] sm:$0xf]
      %v1478 = vsel %vm1043, %v1148, 0
      %v1481 = vsel %vm1043, %v1149, 0
      %v1484 = vsel %vm1043, %v1150, 0
      %v1487 = vsel %vm1043, %v1151, 0
      %v1490 = vsel %vm1182, %v1476, 0
      %1492 = vmatpush.bf16.msra.mxu0 0
      %1493 = vmatpush.bf16.msra.mxu0 0
      %1494 = vmatpush.bf16.msra.mxu0 0
      %1495 = vmatpush.bf16.msra.mxu0 0
      %1496 = vmatpush.bf16.msra.mxu0 0
      %1497 = vmatpush.bf16.msra.mxu0 0
      %1498 = vmatpush.bf16.msra.mxu0 0
      %1499 = vmatpush.bf16.msra.mxu0 %v1490
      %1500 = vmatmul.bf16.gmra.mxu0 %v1478
      %v1501 = vpop.f32.mrf.mxu0
      %v1502 = vadd.f32 0.0, %v1501
      %v1503 = vpop.f32.mrf.mxu0
      %v1504 = vadd.f32 0.0, %v1503
      %1505 = vmatmul.bf16.gmra.mxu0 %v1481
      %v1506 = vpop.f32.mrf.mxu0
      %v1507 = vadd.f32 0.0, %v1506
      %v1508 = vpop.f32.mrf.mxu0
      %v1509 = vadd.f32 0.0, %v1508
      %1510 = vmatmul.bf16.gmra.mxu0 %v1484
      %v1511 = vpop.f32.mrf.mxu0
      %v1512 = vadd.f32 0.0, %v1511
      %v1513 = vpop.f32.mrf.mxu0
      %v1514 = vadd.f32 0.0, %v1513
      %1515 = vmatmul.bf16.gmra.mxu0 %v1487
      %v1516 = vpop.f32.mrf.mxu0
      %v1517 = vadd.f32 0.0, %v1516
      %v1518 = vpop.f32.mrf.mxu0
      %v1519 = vadd.f32 0.0, %v1518
      %1520 = vdwg.mxu0
      %v1521 = vadd.f32 %v1467, %v1502
      %v1522 = vadd.f32 %v1468, %v1504
      %v1523 = vadd.f32 %v1469, %v1507
      %v1524 = vadd.f32 %v1470, %v1509
      %v1525 = vadd.f32 %v1471, %v1512
      %v1526 = vadd.f32 %v1472, %v1514
      %v1527 = vadd.f32 %v1473, %v1517
      %v1528 = vadd.f32 %v1474, %v1519
      %s1529 = scalar_lea.vmem %s5, 28
      %v1530 = vld [vmem:[%s1529] sm:$0xf]
      %v1532 = vsel %vm1043, %v1153, 0
      %v1535 = vsel %vm1182, %v1530, 0
      %1537 = vmatpush.bf16.msra.mxu0 0
      %1538 = vmatpush.bf16.msra.mxu0 0
      %1539 = vmatpush.bf16.msra.mxu0 0
      %1540 = vmatpush.bf16.msra.mxu0 0
      %1541 = vmatpush.bf16.msra.mxu0 0
      %1542 = vmatpush.bf16.msra.mxu0 0
      %1543 = vmatpush.bf16.msra.mxu0 0
      %1544 = vmatpush.bf16.msra.mxu0 %v1535
      %1545 = vmatmul.bf16.gmra.mxu0 %v1174
      %v1546 = vpop.f32.mrf.mxu0
      %v1547 = vadd.f32 0.0, %v1546
      %v1548 = vpop.f32.mrf.mxu0
      %v1549 = vadd.f32 0.0, %v1548
      %1550 = vmatmul.bf16.gmra.mxu0 %v1177
      %v1551 = vpop.f32.mrf.mxu0
      %v1552 = vadd.f32 0.0, %v1551
      %v1553 = vpop.f32.mrf.mxu0
      %v1554 = vadd.f32 0.0, %v1553
      %1555 = vmatmul.bf16.gmra.mxu0 %v1180
      %v1556 = vpop.f32.mrf.mxu0
      %v1557 = vadd.f32 0.0, %v1556
      %v1558 = vpop.f32.mrf.mxu0
      %v1559 = vadd.f32 0.0, %v1558
      %1560 = vmatmul.bf16.gmra.mxu0 %v1532
      %v1561 = vpop.f32.mrf.mxu0
      %v1562 = vadd.f32 0.0, %v1561
      %v1563 = vpop.f32.mrf.mxu0
      %v1564 = vadd.f32 0.0, %v1563
      %1565 = vdwg.mxu0
      %v1566 = vadd.f32 %v1521, %v1547
      %v1567 = vadd.f32 %v1522, %v1549
      %v1568 = vadd.f32 %v1523, %v1552
      %v1569 = vadd.f32 %v1524, %v1554
      %v1570 = vadd.f32 %v1525, %v1557
      %v1571 = vadd.f32 %v1526, %v1559
      %v1572 = vadd.f32 %v1527, %v1562
      %v1573 = vadd.f32 %v1528, %v1564
      %s1574 = scalar_lea.vmem %s5, 32
      %v1575 = vld [vmem:[%s1574] sm:$0xf]
      %v1577 = vsel %vm1043, %v1163, 0
      %v1580 = vsel %vm1043, %v1164, 0
      %v1583 = vsel %vm1043, %v1165, 0
      %v1586 = vsel %vm1043, %v1166, 0
      %v1589 = vsel %vm1182, %v1575, 0
      %1591 = vmatpush.bf16.msra.mxu0 0
      %1592 = vmatpush.bf16.msra.mxu0 0
      %1593 = vmatpush.bf16.msra.mxu0 0
      %1594 = vmatpush.bf16.msra.mxu0 0
      %1595 = vmatpush.bf16.msra.mxu0 0
      %1596 = vmatpush.bf16.msra.mxu0 0
      %1597 = vmatpush.bf16.msra.mxu0 0
      %1598 = vmatpush.bf16.msra.mxu0 %v1589
      %1599 = vmatmul.bf16.gmra.mxu0 %v1577
      %v1600 = vpop.f32.mrf.mxu0
      %v1601 = vadd.f32 0.0, %v1600
      %v1602 = vpop.f32.mrf.mxu0
      %v1603 = vadd.f32 0.0, %v1602
      %1604 = vmatmul.bf16.gmra.mxu0 %v1580
      %v1605 = vpop.f32.mrf.mxu0
      %v1606 = vadd.f32 0.0, %v1605
      %v1607 = vpop.f32.mrf.mxu0
      %v1608 = vadd.f32 0.0, %v1607
      %1609 = vmatmul.bf16.gmra.mxu0 %v1583
      %v1610 = vpop.f32.mrf.mxu0
      %v1611 = vadd.f32 0.0, %v1610
      %v1612 = vpop.f32.mrf.mxu0
      %v1613 = vadd.f32 0.0, %v1612
      %1614 = vmatmul.bf16.gmra.mxu0 %v1586
      %v1615 = vpop.f32.mrf.mxu0
      %v1616 = vadd.f32 0.0, %v1615
      %v1617 = vpop.f32.mrf.mxu0
      %v1618 = vadd.f32 0.0, %v1617
      %1619 = vdwg.mxu0
      %v1620 = vadd.f32 %v1566, %v1601
      %v1621 = vadd.f32 %v1567, %v1603
      %v1622 = vadd.f32 %v1568, %v1606
      %v1623 = vadd.f32 %v1569, %v1608
      %v1624 = vadd.f32 %v1570, %v1611
      %v1625 = vadd.f32 %v1571, %v1613
      %v1626 = vadd.f32 %v1572, %v1616
      %v1627 = vadd.f32 %v1573, %v1618
      %v1628 = vld [vmem:[%s6] sm:$0x1]
      %v1630 = vperm.slane %v1628, 0
      %v1632 = vadd.f32 %v1620, %v1630
      %v1633 = vadd.f32 %v1621, %v1630
      %v1634 = vadd.f32 %v1622, %v1630
      %v1635 = vadd.f32 %v1623, %v1630
      %v1636 = vadd.f32 %v1624, %v1630
      %v1637 = vadd.f32 %v1625, %v1630
      %v1638 = vadd.f32 %v1626, %v1630
      %v1639 = vadd.f32 %v1627, %v1630
      %v1640 = vadd.f32 %v1632, %v1024
      %v1641 = vadd.f32 %v1633, %v1026
      %v1642 = vadd.f32 %v1634, %v1029
      %v1643 = vadd.f32 %v1635, %v1031
      %v1644 = vadd.f32 %v1636, %v1034
      %v1645 = vadd.f32 %v1637, %v1036
      %v1646 = vadd.f32 %v1638, %v1039
      %v1647 = vadd.f32 %v1639, %v1041
      %v1648 = vmax.f32 %v1640, 0.0
      %v1649 = vmax.f32 %v1641, 0.0
      %v1650 = vmax.f32 %v1642, 0.0
      %v1651 = vmax.f32 %v1643, 0.0
      %v1652 = vmax.f32 %v1644, 0.0
      %v1653 = vmax.f32 %v1645, 0.0
      %v1654 = vmax.f32 %v1646, 0.0
      %v1655 = vmax.f32 %v1647, 0.0
      %1656 = vst.msk [vmem:[%s280] sm:$0xff] %vm1043, %v1648
      %1657 = vst.msk [vmem:[%s280 + $0x8] sm:$0xff] %vm1043, %v1649
      %1658 = vst.msk [vmem:[%s280 + $0x10] sm:$0xff] %vm1043, %v1650
      %1659 = vst.msk [vmem:[%s280 + $0x18] sm:$0xff] %vm1043, %v1651
      %1660 = vst.msk [vmem:[%s280 + $0x20] sm:$0xff] %vm1043, %v1652
      %1661 = vst.msk [vmem:[%s280 + $0x28] sm:$0xff] %vm1043, %v1653
      %1662 = vst.msk [vmem:[%s280 + $0x30] sm:$0xff] %vm1043, %v1654
      %1663 = vst.msk [vmem:[%s280 + $0x38] sm:$0xff] %vm1043, %v1655
      %s1664 = smul.u32 8, %s18
      %p1665 = scmp.lt.s32.totalorder %s1664, 15
      %s1666 = scalar_select %p1665, %s1664, 15
      %s1667 = smul.addr %s1666, 8
      %s1668 = scalar_lea.vmem %s7, %s1667
      // Predicated region
      $region49: #{basic_block.1} parent=47 // pred_check
        %p1669 = pneg %p188
      $region50: #{basic_block.1} parent=47 // pred_check_branch
        %1671 = sbr.rel (%p1669) target = $region52
      $region51: #{basic_block.1} parent=47 // pred_region
        %s1672 = smul.u32 8, %s18
      $region52: #{basic_block.1} parent=47 // pred_fallthru
        _
    $region48: #{basic_block.1} parent=5 // pred_fallthru
      _
    %p1673 = scmp.le.s32.totalorder 2, %s13
    // Predicated region
    $region53: #{basic_block.1} parent=5 // pred_check
      %p1674 = pneg %p1673
    $region54: #{basic_block.1} parent=5 // pred_check_branch
      %1676 = sbr.rel (%p1674) target = $region56
    $region55: #{basic_block.1} parent=5 // pred_region
      %s1677 = ssub.s32 %s13, 2
      // Predicated region
      $region57: #{basic_block.1} parent=55 // pred_check
        %p1678 = pneg %p194
      $region58: #{basic_block.1} parent=55 // pred_check_branch
        %1680 = sbr.rel (%p1678) target = $region60
      $region59: #{basic_block.1} parent=55 // pred_region
        %s1681 = smul.u32 8, %s19
        %p1682 = scmp.lt.s32.totalorder %s1681, 15
        %s1683 = scalar_select %p1682, %s1681, 15
        %s1684 = smul.addr %s1683, 8
        %s1685 = scalar_lea.vmem %s7, %s1684
      $region60: #{basic_block.1} parent=55 // pred_fallthru
        _
    $region56: #{basic_block.1} parent=5 // pred_fallthru
      _
  $region6: #{basic_block.1} parent=0 // loop_footer
    %s17 = sadd.s32 1, %s13
  $region7: #{basic_block.1} parent=0 // loop_footer_branch
    %12 = sbr.rel target = $region3
  $region8: #{basic_block.1} parent=0 // loop_exit
    _

</llo_original>
